<compile_context>
chip_gen: v7x
topology: tpu7x:2x2x1
jax: 0.10.0
libtpu: 0.0.40
codegen_flags: <defaults>
</compile_context>

<pallas_src>
import functools

import jax
import jax.numpy as jnp
from jax.experimental import pallas as pl
from jax.experimental.pallas import tpu as pltpu


def _attn_kernel(x_ref, wq_ref, wk_ref, wv_ref, wp_ref, b_ref, o_ref,
                 *, num_heads: int, batch_tile: int):
    BtN, C = x_ref.shape
    Bt = batch_tile
    N = BtN // Bt
    hd = C // num_heads

    x2d = x_ref[...]                                    # (Bt*N, C) bf16, contiguous slab

    # Fused Q/K/V projections: three wide MXU matmuls (scale pre-folded into wq).
    q2d = jnp.dot(x2d, wq_ref[...],
                  preferred_element_type=jnp.float32).astype(jnp.bfloat16)   # (Bt*N, C)
    k2d = jnp.dot(x2d, wk_ref[...],
                  preferred_element_type=jnp.float32).astype(jnp.bfloat16)
    v2d = jnp.dot(x2d, wv_ref[...],
                  preferred_element_type=jnp.float32).astype(jnp.bfloat16)

    head_outs = []
    # Static unrolled loop over heads; per-head operands are lane slices.
    for h in range(num_heads):
        sl = slice(h * hd, (h + 1) * hd)
        q_h = q2d[:, sl].reshape(Bt, N, hd)             # bf16 (Bt, N, hd)
        k_h = k2d[:, sl].reshape(Bt, N, hd)
        v_h = v2d[:, sl].reshape(Bt, N, hd)

        # Scores per batch element (no cross-batch mixing), f32 accumulation.
        s = jnp.einsum("bnd,bmd->bnm", q_h, k_h,
                       preferred_element_type=jnp.float32)                   # (Bt, N, N)

        # Softmax in f32 (kept f32 for v5e; bf16 post-max is an option on v6e/v7x).
        s = s - jnp.max(s, axis=-1, keepdims=True)
        p = jnp.exp(s)
        denom = jnp.sum(p, axis=-1, keepdims=True)
        p = p * pl.reciprocal(denom, approx=True)       # EUP slot, ~free
        # attn_drop is identity (p = 0.0)

        o_h = jnp.einsum("bnm,bmd->bnd", p.astype(jnp.bfloat16), v_h,
                         preferred_element_type=jnp.float32)                 # (Bt, N, hd)
        head_outs.append(o_h.astype(jnp.bfloat16))      # drop to bf16 before holding

    # Register-resident head concat in bf16 (no VMEM scratch round-trip).
    heads2d = jnp.concatenate(head_outs, axis=-1).reshape(Bt * N, C)         # bf16

    # Output projection: (Bt*N, C) @ (C, C) + bias (weight already transposed).
    y = jnp.dot(heads2d, wp_ref[...], preferred_element_type=jnp.float32)
    y = y + b_ref[...]                                  # (1, C) f32 bias, broadcast
    # proj_drop is identity (p = 0.0)
    o_ref[...] = y.astype(o_ref.dtype)                  # single contiguous (Bt*N, C) store


def prepare_attention_weights(w_qkv, w_proj, b_proj, *, num_heads: int,
                              compute_dtype=jnp.bfloat16):
    """Host-side re-layout (hoist/cache this when weights are static across calls).

    PyTorch Linear computes x @ W^T; the qkv out-channel order is s*C + h*hd + d,
    so transposing each C-row section directly yields head-major columns.
    The attention scale is folded into the Q weight here.
    """
    three_c, C = w_qkv.shape
    assert three_c == 3 * C and C % num_heads == 0
    hd = C // num_heads
    scale = float(hd) ** -0.5
    wq = (w_qkv[0 * C:1 * C].T * scale).astype(compute_dtype)   # (C, C), scale folded
    wk = w_qkv[1 * C:2 * C].T.astype(compute_dtype)             # (C, C)
    wv = w_qkv[2 * C:3 * C].T.astype(compute_dtype)             # (C, C)
    wp = w_proj.T.astype(compute_dtype)                         # (C, C), x @ wp form
    bp = b_proj.reshape(1, C).astype(jnp.float32)               # (1, C)
    return wq, wk, wv, wp, bp


def _pick_batch_tile(B: int, N: int, *, target_rows: int = 256,
                     min_grid_steps: int = 2) -> int:
    """Largest divisor of B with Bt*N <= ~target MXU rows, while keeping the
    grid >= min_grid_steps when B allows (feeds both v7x TensorCores)."""
    max_bt = B // min_grid_steps if B >= min_grid_steps else B
    max_bt = max(1, max_bt)
    best = 1
    for bt in range(1, B + 1):
        if B % bt == 0 and bt <= max_bt and bt * N <= max(target_rows, N):
            best = bt
    return best


def attention_block(x, w_qkv, w_proj, b_proj, *, num_heads: int,
                    batch_tile=None, prepared_weights=None):
    """x: (B, N, C); w_qkv: (3C, C); w_proj: (C, C); b_proj: (C,).  PyTorch layout.

    Pass `prepared_weights=prepare_attention_weights(...)` to hoist the weight
    re-layout out of the per-call path.
    """
    B, N, C = x.shape
    assert C % num_heads == 0

    if prepared_weights is None:
        prepared_weights = prepare_attention_weights(
            w_qkv, w_proj, b_proj, num_heads=num_heads)
    wq, wk, wv, wp, bp = prepared_weights

    if batch_tile is None:
        batch_tile = _pick_batch_tile(B, N)
    assert B % batch_tile == 0
    Bt = batch_tile
    out_dtype = x.dtype

    # 2-D kernel I/O: fold batch into the matmul M dimension in the wrapper.
    x2d = x.reshape(B * N, C).astype(jnp.bfloat16)

    kernel = functools.partial(_attn_kernel, num_heads=num_heads, batch_tile=Bt)

    out2d = pl.pallas_call(
        kernel,
        out_shape=jax.ShapeDtypeStruct((B * N, C), out_dtype),
        grid_spec=pltpu.PrefetchScalarGridSpec(
            num_scalar_prefetch=0,
            grid=(B // Bt,),
            in_specs=[
                pl.BlockSpec((Bt * N, C), lambda b: (b, 0)),   # x slab (batch tile)
                pl.BlockSpec((C, C), lambda b: (0, 0)),        # wq (scale folded in)
                pl.BlockSpec((C, C), lambda b: (0, 0)),        # wk
                pl.BlockSpec((C, C), lambda b: (0, 0)),        # wv
                pl.BlockSpec((C, C), lambda b: (0, 0)),        # proj weight^T
                pl.BlockSpec((1, C), lambda b: (0, 0)),        # proj bias
            ],
            out_specs=pl.BlockSpec((Bt * N, C), lambda b: (b, 0)),
        ),
        compiler_params=pltpu.CompilerParams(
            dimension_semantics=("parallel",)),
    )(x2d, wq, wk, wv, wp, bp)

    return out2d.reshape(B, N, C)


def attention_block_ref(x, w_qkv, w_proj, b_proj, *, num_heads: int):
    """Pure-JAX f32 reference mirroring the PyTorch forward exactly."""
    B, N, C = x.shape
    hd = C // num_heads
    scale = hd ** -0.5
    qkv = x @ w_qkv.T                                             # (B, N, 3C)
    qkv = qkv.reshape(B, N, 3, num_heads, hd).transpose(2, 0, 3, 1, 4)
    q, k, v = qkv[0], qkv[1], qkv[2]                              # (B, H, N, hd)
    attn = jnp.einsum("bhnd,bhmd->bhnm", q, k) * scale
    attn = jax.nn.softmax(attn, axis=-1)
    out = jnp.einsum("bhnm,bhmd->bhnd", attn, v)                  # (B, H, N, hd)
    out = out.transpose(0, 2, 1, 3).reshape(B, N, C)
    return out @ w_proj.T + b_proj


if __name__ == "__main__":
    # Small shapes consistent with the module: B=2, N=16 tokens, C=64 channels, 8 heads.
    B, N, C, num_heads = 2, 16, 64, 8

    key = jax.random.PRNGKey(0)
    kx, kqkv, kproj, kb = jax.random.split(key, 4)
    x = jax.random.normal(kx, (B, N, C), dtype=jnp.float32)
    # qkv_bias=False -> no qkv bias; proj has bias.
    w_qkv = jax.random.normal(kqkv, (3 * C, C), dtype=jnp.float32) * 0.05
    w_proj = jax.random.normal(kproj, (C, C), dtype=jnp.float32) * 0.05
    b_proj = jax.random.normal(kb, (C,), dtype=jnp.float32) * 0.05

    # TODO(synk): 'Local' mixer additive attention mask (HW given) not implemented;
    # this covers the Global mixer / HW=None configuration only.

    prepared = prepare_attention_weights(w_qkv, w_proj, b_proj, num_heads=num_heads)
    out = attention_block(x, w_qkv, w_proj, b_proj, num_heads=num_heads,
                          prepared_weights=prepared)
    out = jax.block_until_ready(out)

    ref = attention_block_ref(x, w_qkv, w_proj, b_proj, num_heads=num_heads)
    assert out.shape == (B, N, C)
    # bf16 MXU operands + approx reciprocal -> loosened tolerance (attention rows
    # sum to 1 only within ~1e-3 relative; fine for inference).
    assert jnp.allclose(out, ref, atol=2e-2, rtol=2e-2), "mismatch vs reference"

    print("KERNEL_OK")
</pallas_src>

<mosaic_0001>
module attributes {stable_mosaic.version = 11 : i64} {
  func.func @_attn_kernel(%arg0: i32, %arg1: memref<16x64xbf16, #tpu.memory_space<vmem>>, %arg2: memref<64x64xbf16, #tpu.memory_space<vmem>>, %arg3: memref<64x64xbf16, #tpu.memory_space<vmem>>, %arg4: memref<64x64xbf16, #tpu.memory_space<vmem>>, %arg5: memref<64x64xbf16, #tpu.memory_space<vmem>>, %arg6: memref<1x64xf32, #tpu.memory_space<vmem>>, %arg7: memref<16x64xf32, #tpu.memory_space<vmem>>) attributes {dimension_semantics = [#tpu.dimension_semantics<parallel>], iteration_bounds = array<i64: 2>, scalar_prefetch = 0 : i64, scratch_operands = 0 : i64, tpu.core_type = #tpu.core_type<tc>, window_params = [{transform_indices = @transform_0, window_bounds = array<i64: 16, 64>}, {pipeline_mode = #tpu.pipeline_mode<synchronous>, transform_indices = @transform_1, window_bounds = array<i64: 64, 64>}, {pipeline_mode = #tpu.pipeline_mode<synchronous>, transform_indices = @transform_2, window_bounds = array<i64: 64, 64>}, {pipeline_mode = #tpu.pipeline_mode<synchronous>, transform_indices = @transform_3, window_bounds = array<i64: 64, 64>}, {pipeline_mode = #tpu.pipeline_mode<synchronous>, transform_indices = @transform_4, window_bounds = array<i64: 64, 64>}, {pipeline_mode = #tpu.pipeline_mode<synchronous>, transform_indices = @transform_5, window_bounds = array<i64: 1, 64>}, {transform_indices = @transform_6, window_bounds = array<i64: 16, 64>}]} {
    %c0 = arith.constant 0 : index
    %c0_0 = arith.constant 0 : index
    %0 = vector.load %arg1[%c0, %c0_0] : memref<16x64xbf16, #tpu.memory_space<vmem>>, vector<16x64xbf16>
    %c0_1 = arith.constant 0 : index
    %c0_2 = arith.constant 0 : index
    %1 = vector.load %arg2[%c0_1, %c0_2] : memref<64x64xbf16, #tpu.memory_space<vmem>>, vector<64x64xbf16>
    %cst = arith.constant dense<0.000000e+00> : vector<16x64xf32>
    %2 = tpu.matmul %0, %1, %cst {dimension_numbers = #tpu.dot_dimension_numbers<[1], [0], [0], [1], [0, 0, 1, 1], [], []>} : vector<16x64xbf16>, vector<64x64xbf16>, vector<16x64xf32> -> vector<16x64xf32>
    %3 = arith.truncf %2 : vector<16x64xf32> to vector<16x64xbf16>
    %c0_3 = arith.constant 0 : index
    %c0_4 = arith.constant 0 : index
    %4 = vector.load %arg3[%c0_3, %c0_4] : memref<64x64xbf16, #tpu.memory_space<vmem>>, vector<64x64xbf16>
    %cst_5 = arith.constant dense<0.000000e+00> : vector<16x64xf32>
    %5 = tpu.matmul %0, %4, %cst_5 {dimension_numbers = #tpu.dot_dimension_numbers<[1], [0], [0], [1], [0, 0, 1, 1], [], []>} : vector<16x64xbf16>, vector<64x64xbf16>, vector<16x64xf32> -> vector<16x64xf32>
    %6 = arith.truncf %5 : vector<16x64xf32> to vector<16x64xbf16>
    %c0_6 = arith.constant 0 : index
    %c0_7 = arith.constant 0 : index
    %7 = vector.load %arg4[%c0_6, %c0_7] : memref<64x64xbf16, #tpu.memory_space<vmem>>, vector<64x64xbf16>
    %cst_8 = arith.constant dense<0.000000e+00> : vector<16x64xf32>
    %8 = tpu.matmul %0, %7, %cst_8 {dimension_numbers = #tpu.dot_dimension_numbers<[1], [0], [0], [1], [0, 0, 1, 1], [], []>} : vector<16x64xbf16>, vector<64x64xbf16>, vector<16x64xf32> -> vector<16x64xf32>
    %9 = arith.truncf %8 : vector<16x64xf32> to vector<16x64xbf16>
    %10 = vector.extract_strided_slice %3 {offsets = [0, 0], sizes = [16, 8], strides = [1, 1]} : vector<16x64xbf16> to vector<16x8xbf16>
    %11 = vector.shape_cast %10 : vector<16x8xbf16> to vector<1x16x8xbf16>
    %12 = vector.extract_strided_slice %6 {offsets = [0, 0], sizes = [16, 8], strides = [1, 1]} : vector<16x64xbf16> to vector<16x8xbf16>
    %13 = vector.shape_cast %12 : vector<16x8xbf16> to vector<1x16x8xbf16>
    %14 = vector.extract_strided_slice %9 {offsets = [0, 0], sizes = [16, 8], strides = [1, 1]} : vector<16x64xbf16> to vector<16x8xbf16>
    %15 = vector.shape_cast %14 : vector<16x8xbf16> to vector<1x16x8xbf16>
    "tpu.trace_start"() <{level = 10 : i32, message = "bnd,bmd->bnm"}> : () -> ()
    %cst_9 = arith.constant dense<0.000000e+00> : vector<1x16x16xf32>
    %16 = tpu.matmul %11, %13, %cst_9 {dimension_numbers = #tpu.dot_dimension_numbers<[2], [2], [1], [1], [0, 0, 0, 1, 1, 1], [0], [0]>} : vector<1x16x8xbf16>, vector<1x16x8xbf16>, vector<1x16x16xf32> -> vector<1x16x16xf32>
    "tpu.trace_stop"() : () -> ()
    %cst_10 = arith.constant dense<0xFF800000> : vector<1x16xf32>
    %17 = vector.multi_reduction <maximumf>, %16, %cst_10 [2] : vector<1x16x16xf32> to vector<1x16xf32>
    %18 = vector.shape_cast %17 : vector<1x16xf32> to vector<1x16x1xf32>
    %19 = vector.broadcast %18 : vector<1x16x1xf32> to vector<1x16x16xf32>
    %20 = arith.subf %16, %19 : vector<1x16x16xf32>
    %21 = math.exp %20 : vector<1x16x16xf32>
    %cst_11 = arith.constant dense<0.000000e+00> : vector<1x16xf32>
    %22 = vector.multi_reduction <add>, %21, %cst_11 [2] : vector<1x16x16xf32> to vector<1x16xf32>
    %23 = vector.shape_cast %22 : vector<1x16xf32> to vector<1x16x1xf32>
    %24 = tpu.reciprocal %23 {approx = true} : vector<1x16x1xf32> -> vector<1x16x1xf32>
    %25 = vector.broadcast %24 : vector<1x16x1xf32> to vector<1x16x16xf32>
    %26 = arith.mulf %21, %25 : vector<1x16x16xf32>
    %27 = arith.truncf %26 : vector<1x16x16xf32> to vector<1x16x16xbf16>
    "tpu.trace_start"() <{level = 10 : i32, message = "bnm,bmd->bnd"}> : () -> ()
    %cst_12 = arith.constant dense<0.000000e+00> : vector<1x16x8xf32>
    %28 = tpu.matmul %27, %15, %cst_12 {dimension_numbers = #tpu.dot_dimension_numbers<[2], [1], [1], [2], [0, 0, 0, 1, 1, 2], [0], [0]>} : vector<1x16x16xbf16>, vector<1x16x8xbf16>, vector<1x16x8xf32> -> vector<1x16x8xf32>
    "tpu.trace_stop"() : () -> ()
    %29 = arith.truncf %28 : vector<1x16x8xf32> to vector<1x16x8xbf16>
    %30 = vector.extract_strided_slice %3 {offsets = [0, 8], sizes = [16, 8], strides = [1, 1]} : vector<16x64xbf16> to vector<16x8xbf16>
    %31 = vector.shape_cast %30 : vector<16x8xbf16> to vector<1x16x8xbf16>
    %32 = vector.extract_strided_slice %6 {offsets = [0, 8], sizes = [16, 8], strides = [1, 1]} : vector<16x64xbf16> to vector<16x8xbf16>
    %33 = vector.shape_cast %32 : vector<16x8xbf16> to vector<1x16x8xbf16>
    %34 = vector.extract_strided_slice %9 {offsets = [0, 8], sizes = [16, 8], strides = [1, 1]} : vector<16x64xbf16> to vector<16x8xbf16>
    %35 = vector.shape_cast %34 : vector<16x8xbf16> to vector<1x16x8xbf16>
    "tpu.trace_start"() <{level = 10 : i32, message = "bnd,bmd->bnm"}> : () -> ()
    %cst_13 = arith.constant dense<0.000000e+00> : vector<1x16x16xf32>
    %36 = tpu.matmul %31, %33, %cst_13 {dimension_numbers = #tpu.dot_dimension_numbers<[2], [2], [1], [1], [0, 0, 0, 1, 1, 1], [0], [0]>} : vector<1x16x8xbf16>, vector<1x16x8xbf16>, vector<1x16x16xf32> -> vector<1x16x16xf32>
    "tpu.trace_stop"() : () -> ()
    %cst_14 = arith.constant dense<0xFF800000> : vector<1x16xf32>
    %37 = vector.multi_reduction <maximumf>, %36, %cst_14 [2] : vector<1x16x16xf32> to vector<1x16xf32>
    %38 = vector.shape_cast %37 : vector<1x16xf32> to vector<1x16x1xf32>
    %39 = vector.broadcast %38 : vector<1x16x1xf32> to vector<1x16x16xf32>
    %40 = arith.subf %36, %39 : vector<1x16x16xf32>
    %41 = math.exp %40 : vector<1x16x16xf32>
    %cst_15 = arith.constant dense<0.000000e+00> : vector<1x16xf32>
    %42 = vector.multi_reduction <add>, %41, %cst_15 [2] : vector<1x16x16xf32> to vector<1x16xf32>
    %43 = vector.shape_cast %42 : vector<1x16xf32> to vector<1x16x1xf32>
    %44 = tpu.reciprocal %43 {approx = true} : vector<1x16x1xf32> -> vector<1x16x1xf32>
    %45 = vector.broadcast %44 : vector<1x16x1xf32> to vector<1x16x16xf32>
    %46 = arith.mulf %41, %45 : vector<1x16x16xf32>
    %47 = arith.truncf %46 : vector<1x16x16xf32> to vector<1x16x16xbf16>
    "tpu.trace_start"() <{level = 10 : i32, message = "bnm,bmd->bnd"}> : () -> ()
    %cst_16 = arith.constant dense<0.000000e+00> : vector<1x16x8xf32>
    %48 = tpu.matmul %47, %35, %cst_16 {dimension_numbers = #tpu.dot_dimension_numbers<[2], [1], [1], [2], [0, 0, 0, 1, 1, 2], [0], [0]>} : vector<1x16x16xbf16>, vector<1x16x8xbf16>, vector<1x16x8xf32> -> vector<1x16x8xf32>
    "tpu.trace_stop"() : () -> ()
    %49 = arith.truncf %48 : vector<1x16x8xf32> to vector<1x16x8xbf16>
    %50 = vector.extract_strided_slice %3 {offsets = [0, 16], sizes = [16, 8], strides = [1, 1]} : vector<16x64xbf16> to vector<16x8xbf16>
    %51 = vector.shape_cast %50 : vector<16x8xbf16> to vector<1x16x8xbf16>
    %52 = vector.extract_strided_slice %6 {offsets = [0, 16], sizes = [16, 8], strides = [1, 1]} : vector<16x64xbf16> to vector<16x8xbf16>
    %53 = vector.shape_cast %52 : vector<16x8xbf16> to vector<1x16x8xbf16>
    %54 = vector.extract_strided_slice %9 {offsets = [0, 16], sizes = [16, 8], strides = [1, 1]} : vector<16x64xbf16> to vector<16x8xbf16>
    %55 = vector.shape_cast %54 : vector<16x8xbf16> to vector<1x16x8xbf16>
    "tpu.trace_start"() <{level = 10 : i32, message = "bnd,bmd->bnm"}> : () -> ()
    %cst_17 = arith.constant dense<0.000000e+00> : vector<1x16x16xf32>
    %56 = tpu.matmul %51, %53, %cst_17 {dimension_numbers = #tpu.dot_dimension_numbers<[2], [2], [1], [1], [0, 0, 0, 1, 1, 1], [0], [0]>} : vector<1x16x8xbf16>, vector<1x16x8xbf16>, vector<1x16x16xf32> -> vector<1x16x16xf32>
    "tpu.trace_stop"() : () -> ()
    %cst_18 = arith.constant dense<0xFF800000> : vector<1x16xf32>
    %57 = vector.multi_reduction <maximumf>, %56, %cst_18 [2] : vector<1x16x16xf32> to vector<1x16xf32>
    %58 = vector.shape_cast %57 : vector<1x16xf32> to vector<1x16x1xf32>
    %59 = vector.broadcast %58 : vector<1x16x1xf32> to vector<1x16x16xf32>
    %60 = arith.subf %56, %59 : vector<1x16x16xf32>
    %61 = math.exp %60 : vector<1x16x16xf32>
    %cst_19 = arith.constant dense<0.000000e+00> : vector<1x16xf32>
    %62 = vector.multi_reduction <add>, %61, %cst_19 [2] : vector<1x16x16xf32> to vector<1x16xf32>
    %63 = vector.shape_cast %62 : vector<1x16xf32> to vector<1x16x1xf32>
    %64 = tpu.reciprocal %63 {approx = true} : vector<1x16x1xf32> -> vector<1x16x1xf32>
    %65 = vector.broadcast %64 : vector<1x16x1xf32> to vector<1x16x16xf32>
    %66 = arith.mulf %61, %65 : vector<1x16x16xf32>
    %67 = arith.truncf %66 : vector<1x16x16xf32> to vector<1x16x16xbf16>
    "tpu.trace_start"() <{level = 10 : i32, message = "bnm,bmd->bnd"}> : () -> ()
    %cst_20 = arith.constant dense<0.000000e+00> : vector<1x16x8xf32>
    %68 = tpu.matmul %67, %55, %cst_20 {dimension_numbers = #tpu.dot_dimension_numbers<[2], [1], [1], [2], [0, 0, 0, 1, 1, 2], [0], [0]>} : vector<1x16x16xbf16>, vector<1x16x8xbf16>, vector<1x16x8xf32> -> vector<1x16x8xf32>
    "tpu.trace_stop"() : () -> ()
    %69 = arith.truncf %68 : vector<1x16x8xf32> to vector<1x16x8xbf16>
    %70 = vector.extract_strided_slice %3 {offsets = [0, 24], sizes = [16, 8], strides = [1, 1]} : vector<16x64xbf16> to vector<16x8xbf16>
    %71 = vector.shape_cast %70 : vector<16x8xbf16> to vector<1x16x8xbf16>
    %72 = vector.extract_strided_slice %6 {offsets = [0, 24], sizes = [16, 8], strides = [1, 1]} : vector<16x64xbf16> to vector<16x8xbf16>
    %73 = vector.shape_cast %72 : vector<16x8xbf16> to vector<1x16x8xbf16>
    %74 = vector.extract_strided_slice %9 {offsets = [0, 24], sizes = [16, 8], strides = [1, 1]} : vector<16x64xbf16> to vector<16x8xbf16>
    %75 = vector.shape_cast %74 : vector<16x8xbf16> to vector<1x16x8xbf16>
    "tpu.trace_start"() <{level = 10 : i32, message = "bnd,bmd->bnm"}> : () -> ()
    %cst_21 = arith.constant dense<0.000000e+00> : vector<1x16x16xf32>
    %76 = tpu.matmul %71, %73, %cst_21 {dimension_numbers = #tpu.dot_dimension_numbers<[2], [2], [1], [1], [0, 0, 0, 1, 1, 1], [0], [0]>} : vector<1x16x8xbf16>, vector<1x16x8xbf16>, vector<1x16x16xf32> -> vector<1x16x16xf32>
    "tpu.trace_stop"() : () -> ()
    %cst_22 = arith.constant dense<0xFF800000> : vector<1x16xf32>
    %77 = vector.multi_reduction <maximumf>, %76, %cst_22 [2] : vector<1x16x16xf32> to vector<1x16xf32>
    %78 = vector.shape_cast %77 : vector<1x16xf32> to vector<1x16x1xf32>
    %79 = vector.broadcast %78 : vector<1x16x1xf32> to vector<1x16x16xf32>
    %80 = arith.subf %76, %79 : vector<1x16x16xf32>
    %81 = math.exp %80 : vector<1x16x16xf32>
    %cst_23 = arith.constant dense<0.000000e+00> : vector<1x16xf32>
    %82 = vector.multi_reduction <add>, %81, %cst_23 [2] : vector<1x16x16xf32> to vector<1x16xf32>
    %83 = vector.shape_cast %82 : vector<1x16xf32> to vector<1x16x1xf32>
    %84 = tpu.reciprocal %83 {approx = true} : vector<1x16x1xf32> -> vector<1x16x1xf32>
    %85 = vector.broadcast %84 : vector<1x16x1xf32> to vector<1x16x16xf32>
    %86 = arith.mulf %81, %85 : vector<1x16x16xf32>
    %87 = arith.truncf %86 : vector<1x16x16xf32> to vector<1x16x16xbf16>
    "tpu.trace_start"() <{level = 10 : i32, message = "bnm,bmd->bnd"}> : () -> ()
    %cst_24 = arith.constant dense<0.000000e+00> : vector<1x16x8xf32>
    %88 = tpu.matmul %87, %75, %cst_24 {dimension_numbers = #tpu.dot_dimension_numbers<[2], [1], [1], [2], [0, 0, 0, 1, 1, 2], [0], [0]>} : vector<1x16x16xbf16>, vector<1x16x8xbf16>, vector<1x16x8xf32> -> vector<1x16x8xf32>
    "tpu.trace_stop"() : () -> ()
    %89 = arith.truncf %88 : vector<1x16x8xf32> to vector<1x16x8xbf16>
    %90 = vector.extract_strided_slice %3 {offsets = [0, 32], sizes = [16, 8], strides = [1, 1]} : vector<16x64xbf16> to vector<16x8xbf16>
    %91 = vector.shape_cast %90 : vector<16x8xbf16> to vector<1x16x8xbf16>
    %92 = vector.extract_strided_slice %6 {offsets = [0, 32], sizes = [16, 8], strides = [1, 1]} : vector<16x64xbf16> to vector<16x8xbf16>
    %93 = vector.shape_cast %92 : vector<16x8xbf16> to vector<1x16x8xbf16>
    %94 = vector.extract_strided_slice %9 {offsets = [0, 32], sizes = [16, 8], strides = [1, 1]} : vector<16x64xbf16> to vector<16x8xbf16>
    %95 = vector.shape_cast %94 : vector<16x8xbf16> to vector<1x16x8xbf16>
    "tpu.trace_start"() <{level = 10 : i32, message = "bnd,bmd->bnm"}> : () -> ()
    %cst_25 = arith.constant dense<0.000000e+00> : vector<1x16x16xf32>
    %96 = tpu.matmul %91, %93, %cst_25 {dimension_numbers = #tpu.dot_dimension_numbers<[2], [2], [1], [1], [0, 0, 0, 1, 1, 1], [0], [0]>} : vector<1x16x8xbf16>, vector<1x16x8xbf16>, vector<1x16x16xf32> -> vector<1x16x16xf32>
    "tpu.trace_stop"() : () -> ()
    %cst_26 = arith.constant dense<0xFF800000> : vector<1x16xf32>
    %97 = vector.multi_reduction <maximumf>, %96, %cst_26 [2] : vector<1x16x16xf32> to vector<1x16xf32>
    %98 = vector.shape_cast %97 : vector<1x16xf32> to vector<1x16x1xf32>
    %99 = vector.broadcast %98 : vector<1x16x1xf32> to vector<1x16x16xf32>
    %100 = arith.subf %96, %99 : vector<1x16x16xf32>
    %101 = math.exp %100 : vector<1x16x16xf32>
    %cst_27 = arith.constant dense<0.000000e+00> : vector<1x16xf32>
    %102 = vector.multi_reduction <add>, %101, %cst_27 [2] : vector<1x16x16xf32> to vector<1x16xf32>
    %103 = vector.shape_cast %102 : vector<1x16xf32> to vector<1x16x1xf32>
    %104 = tpu.reciprocal %103 {approx = true} : vector<1x16x1xf32> -> vector<1x16x1xf32>
    %105 = vector.broadcast %104 : vector<1x16x1xf32> to vector<1x16x16xf32>
    %106 = arith.mulf %101, %105 : vector<1x16x16xf32>
    %107 = arith.truncf %106 : vector<1x16x16xf32> to vector<1x16x16xbf16>
    "tpu.trace_start"() <{level = 10 : i32, message = "bnm,bmd->bnd"}> : () -> ()
    %cst_28 = arith.constant dense<0.000000e+00> : vector<1x16x8xf32>
    %108 = tpu.matmul %107, %95, %cst_28 {dimension_numbers = #tpu.dot_dimension_numbers<[2], [1], [1], [2], [0, 0, 0, 1, 1, 2], [0], [0]>} : vector<1x16x16xbf16>, vector<1x16x8xbf16>, vector<1x16x8xf32> -> vector<1x16x8xf32>
    "tpu.trace_stop"() : () -> ()
    %109 = arith.truncf %108 : vector<1x16x8xf32> to vector<1x16x8xbf16>
    %110 = vector.extract_strided_slice %3 {offsets = [0, 40], sizes = [16, 8], strides = [1, 1]} : vector<16x64xbf16> to vector<16x8xbf16>
    %111 = vector.shape_cast %110 : vector<16x8xbf16> to vector<1x16x8xbf16>
    %112 = vector.extract_strided_slice %6 {offsets = [0, 40], sizes = [16, 8], strides = [1, 1]} : vector<16x64xbf16> to vector<16x8xbf16>
    %113 = vector.shape_cast %112 : vector<16x8xbf16> to vector<1x16x8xbf16>
    %114 = vector.extract_strided_slice %9 {offsets = [0, 40], sizes = [16, 8], strides = [1, 1]} : vector<16x64xbf16> to vector<16x8xbf16>
    %115 = vector.shape_cast %114 : vector<16x8xbf16> to vector<1x16x8xbf16>
    "tpu.trace_start"() <{level = 10 : i32, message = "bnd,bmd->bnm"}> : () -> ()
    %cst_29 = arith.constant dense<0.000000e+00> : vector<1x16x16xf32>
    %116 = tpu.matmul %111, %113, %cst_29 {dimension_numbers = #tpu.dot_dimension_numbers<[2], [2], [1], [1], [0, 0, 0, 1, 1, 1], [0], [0]>} : vector<1x16x8xbf16>, vector<1x16x8xbf16>, vector<1x16x16xf32> -> vector<1x16x16xf32>
    "tpu.trace_stop"() : () -> ()
    %cst_30 = arith.constant dense<0xFF800000> : vector<1x16xf32>
    %117 = vector.multi_reduction <maximumf>, %116, %cst_30 [2] : vector<1x16x16xf32> to vector<1x16xf32>
    %118 = vector.shape_cast %117 : vector<1x16xf32> to vector<1x16x1xf32>
    %119 = vector.broadcast %118 : vector<1x16x1xf32> to vector<1x16x16xf32>
    %120 = arith.subf %116, %119 : vector<1x16x16xf32>
    %121 = math.exp %120 : vector<1x16x16xf32>
    %cst_31 = arith.constant dense<0.000000e+00> : vector<1x16xf32>
    %122 = vector.multi_reduction <add>, %121, %cst_31 [2] : vector<1x16x16xf32> to vector<1x16xf32>
    %123 = vector.shape_cast %122 : vector<1x16xf32> to vector<1x16x1xf32>
    %124 = tpu.reciprocal %123 {approx = true} : vector<1x16x1xf32> -> vector<1x16x1xf32>
    %125 = vector.broadcast %124 : vector<1x16x1xf32> to vector<1x16x16xf32>
    %126 = arith.mulf %121, %125 : vector<1x16x16xf32>
    %127 = arith.truncf %126 : vector<1x16x16xf32> to vector<1x16x16xbf16>
    "tpu.trace_start"() <{level = 10 : i32, message = "bnm,bmd->bnd"}> : () -> ()
    %cst_32 = arith.constant dense<0.000000e+00> : vector<1x16x8xf32>
    %128 = tpu.matmul %127, %115, %cst_32 {dimension_numbers = #tpu.dot_dimension_numbers<[2], [1], [1], [2], [0, 0, 0, 1, 1, 2], [0], [0]>} : vector<1x16x16xbf16>, vector<1x16x8xbf16>, vector<1x16x8xf32> -> vector<1x16x8xf32>
    "tpu.trace_stop"() : () -> ()
    %129 = arith.truncf %128 : vector<1x16x8xf32> to vector<1x16x8xbf16>
    %130 = vector.extract_strided_slice %3 {offsets = [0, 48], sizes = [16, 8], strides = [1, 1]} : vector<16x64xbf16> to vector<16x8xbf16>
    %131 = vector.shape_cast %130 : vector<16x8xbf16> to vector<1x16x8xbf16>
    %132 = vector.extract_strided_slice %6 {offsets = [0, 48], sizes = [16, 8], strides = [1, 1]} : vector<16x64xbf16> to vector<16x8xbf16>
    %133 = vector.shape_cast %132 : vector<16x8xbf16> to vector<1x16x8xbf16>
    %134 = vector.extract_strided_slice %9 {offsets = [0, 48], sizes = [16, 8], strides = [1, 1]} : vector<16x64xbf16> to vector<16x8xbf16>
    %135 = vector.shape_cast %134 : vector<16x8xbf16> to vector<1x16x8xbf16>
    "tpu.trace_start"() <{level = 10 : i32, message = "bnd,bmd->bnm"}> : () -> ()
    %cst_33 = arith.constant dense<0.000000e+00> : vector<1x16x16xf32>
    %136 = tpu.matmul %131, %133, %cst_33 {dimension_numbers = #tpu.dot_dimension_numbers<[2], [2], [1], [1], [0, 0, 0, 1, 1, 1], [0], [0]>} : vector<1x16x8xbf16>, vector<1x16x8xbf16>, vector<1x16x16xf32> -> vector<1x16x16xf32>
    "tpu.trace_stop"() : () -> ()
    %cst_34 = arith.constant dense<0xFF800000> : vector<1x16xf32>
    %137 = vector.multi_reduction <maximumf>, %136, %cst_34 [2] : vector<1x16x16xf32> to vector<1x16xf32>
    %138 = vector.shape_cast %137 : vector<1x16xf32> to vector<1x16x1xf32>
    %139 = vector.broadcast %138 : vector<1x16x1xf32> to vector<1x16x16xf32>
    %140 = arith.subf %136, %139 : vector<1x16x16xf32>
    %141 = math.exp %140 : vector<1x16x16xf32>
    %cst_35 = arith.constant dense<0.000000e+00> : vector<1x16xf32>
    %142 = vector.multi_reduction <add>, %141, %cst_35 [2] : vector<1x16x16xf32> to vector<1x16xf32>
    %143 = vector.shape_cast %142 : vector<1x16xf32> to vector<1x16x1xf32>
    %144 = tpu.reciprocal %143 {approx = true} : vector<1x16x1xf32> -> vector<1x16x1xf32>
    %145 = vector.broadcast %144 : vector<1x16x1xf32> to vector<1x16x16xf32>
    %146 = arith.mulf %141, %145 : vector<1x16x16xf32>
    %147 = arith.truncf %146 : vector<1x16x16xf32> to vector<1x16x16xbf16>
    "tpu.trace_start"() <{level = 10 : i32, message = "bnm,bmd->bnd"}> : () -> ()
    %cst_36 = arith.constant dense<0.000000e+00> : vector<1x16x8xf32>
    %148 = tpu.matmul %147, %135, %cst_36 {dimension_numbers = #tpu.dot_dimension_numbers<[2], [1], [1], [2], [0, 0, 0, 1, 1, 2], [0], [0]>} : vector<1x16x16xbf16>, vector<1x16x8xbf16>, vector<1x16x8xf32> -> vector<1x16x8xf32>
    "tpu.trace_stop"() : () -> ()
    %149 = arith.truncf %148 : vector<1x16x8xf32> to vector<1x16x8xbf16>
    %150 = vector.extract_strided_slice %3 {offsets = [0, 56], sizes = [16, 8], strides = [1, 1]} : vector<16x64xbf16> to vector<16x8xbf16>
    %151 = vector.shape_cast %150 : vector<16x8xbf16> to vector<1x16x8xbf16>
    %152 = vector.extract_strided_slice %6 {offsets = [0, 56], sizes = [16, 8], strides = [1, 1]} : vector<16x64xbf16> to vector<16x8xbf16>
    %153 = vector.shape_cast %152 : vector<16x8xbf16> to vector<1x16x8xbf16>
    %154 = vector.extract_strided_slice %9 {offsets = [0, 56], sizes = [16, 8], strides = [1, 1]} : vector<16x64xbf16> to vector<16x8xbf16>
    %155 = vector.shape_cast %154 : vector<16x8xbf16> to vector<1x16x8xbf16>
    "tpu.trace_start"() <{level = 10 : i32, message = "bnd,bmd->bnm"}> : () -> ()
    %cst_37 = arith.constant dense<0.000000e+00> : vector<1x16x16xf32>
    %156 = tpu.matmul %151, %153, %cst_37 {dimension_numbers = #tpu.dot_dimension_numbers<[2], [2], [1], [1], [0, 0, 0, 1, 1, 1], [0], [0]>} : vector<1x16x8xbf16>, vector<1x16x8xbf16>, vector<1x16x16xf32> -> vector<1x16x16xf32>
    "tpu.trace_stop"() : () -> ()
    %cst_38 = arith.constant dense<0xFF800000> : vector<1x16xf32>
    %157 = vector.multi_reduction <maximumf>, %156, %cst_38 [2] : vector<1x16x16xf32> to vector<1x16xf32>
    %158 = vector.shape_cast %157 : vector<1x16xf32> to vector<1x16x1xf32>
    %159 = vector.broadcast %158 : vector<1x16x1xf32> to vector<1x16x16xf32>
    %160 = arith.subf %156, %159 : vector<1x16x16xf32>
    %161 = math.exp %160 : vector<1x16x16xf32>
    %cst_39 = arith.constant dense<0.000000e+00> : vector<1x16xf32>
    %162 = vector.multi_reduction <add>, %161, %cst_39 [2] : vector<1x16x16xf32> to vector<1x16xf32>
    %163 = vector.shape_cast %162 : vector<1x16xf32> to vector<1x16x1xf32>
    %164 = tpu.reciprocal %163 {approx = true} : vector<1x16x1xf32> -> vector<1x16x1xf32>
    %165 = vector.broadcast %164 : vector<1x16x1xf32> to vector<1x16x16xf32>
    %166 = arith.mulf %161, %165 : vector<1x16x16xf32>
    %167 = arith.truncf %166 : vector<1x16x16xf32> to vector<1x16x16xbf16>
    "tpu.trace_start"() <{level = 10 : i32, message = "bnm,bmd->bnd"}> : () -> ()
    %cst_40 = arith.constant dense<0.000000e+00> : vector<1x16x8xf32>
    %168 = tpu.matmul %167, %155, %cst_40 {dimension_numbers = #tpu.dot_dimension_numbers<[2], [1], [1], [2], [0, 0, 0, 1, 1, 2], [0], [0]>} : vector<1x16x16xbf16>, vector<1x16x8xbf16>, vector<1x16x8xf32> -> vector<1x16x8xf32>
    "tpu.trace_stop"() : () -> ()
    %169 = arith.truncf %168 : vector<1x16x8xf32> to vector<1x16x8xbf16>
    %170 = tpu.concatenate %29, %49, %69, %89, %109, %129, %149, %169 in 2 : vector<1x16x8xbf16>, vector<1x16x8xbf16>, vector<1x16x8xbf16>, vector<1x16x8xbf16>, vector<1x16x8xbf16>, vector<1x16x8xbf16>, vector<1x16x8xbf16>, vector<1x16x8xbf16> -> vector<1x16x64xbf16>
    %171 = vector.shape_cast %170 : vector<1x16x64xbf16> to vector<16x64xbf16>
    %c0_41 = arith.constant 0 : index
    %c0_42 = arith.constant 0 : index
    %172 = vector.load %arg5[%c0_41, %c0_42] : memref<64x64xbf16, #tpu.memory_space<vmem>>, vector<64x64xbf16>
    %cst_43 = arith.constant dense<0.000000e+00> : vector<16x64xf32>
    %173 = tpu.matmul %171, %172, %cst_43 {dimension_numbers = #tpu.dot_dimension_numbers<[1], [0], [0], [1], [0, 0, 1, 1], [], []>} : vector<16x64xbf16>, vector<64x64xbf16>, vector<16x64xf32> -> vector<16x64xf32>
    %c0_44 = arith.constant 0 : index
    %c0_45 = arith.constant 0 : index
    %174 = vector.load %arg6[%c0_44, %c0_45] : memref<1x64xf32, #tpu.memory_space<vmem>>, vector<1x64xf32>
    %175 = vector.broadcast %174 : vector<1x64xf32> to vector<16x64xf32>
    %176 = arith.addf %173, %175 : vector<16x64xf32>
    %c0_46 = arith.constant 0 : index
    %c0_47 = arith.constant 0 : index
    %177 = vector.load %arg7[%c0_46, %c0_47] : memref<16x64xf32, #tpu.memory_space<vmem>>, vector<16x64xf32>
    tpu.vector_store %arg7[%c0_46, %c0_47], %176 {strides = array<i32>} : memref<16x64xf32, #tpu.memory_space<vmem>>, vector<16x64xf32>,
    return
  }
  func.func @transform_0(%arg0: i32) -> (i32, i32) {
    %c0_i32 = arith.constant 0 : i32
    %c0_i32_0 = arith.constant 0 : i32
    return %arg0, %c0_i32 : i32, i32
  }
  func.func @transform_1(%arg0: i32) -> (i32, i32) {
    %c0_i32 = arith.constant 0 : i32
    %c0_i32_0 = arith.constant 0 : i32
    %c0_i32_1 = arith.constant 0 : i32
    return %c0_i32, %c0_i32_0 : i32, i32
  }
  func.func @transform_2(%arg0: i32) -> (i32, i32) {
    %c0_i32 = arith.constant 0 : i32
    %c0_i32_0 = arith.constant 0 : i32
    %c0_i32_1 = arith.constant 0 : i32
    return %c0_i32, %c0_i32_0 : i32, i32
  }
  func.func @transform_3(%arg0: i32) -> (i32, i32) {
    %c0_i32 = arith.constant 0 : i32
    %c0_i32_0 = arith.constant 0 : i32
    %c0_i32_1 = arith.constant 0 : i32
    return %c0_i32, %c0_i32_0 : i32, i32
  }
  func.func @transform_4(%arg0: i32) -> (i32, i32) {
    %c0_i32 = arith.constant 0 : i32
    %c0_i32_0 = arith.constant 0 : i32
    %c0_i32_1 = arith.constant 0 : i32
    return %c0_i32, %c0_i32_0 : i32, i32
  }
  func.func @transform_5(%arg0: i32) -> (i32, i32) {
    %c0_i32 = arith.constant 0 : i32
    %c0_i32_0 = arith.constant 0 : i32
    %c0_i32_1 = arith.constant 0 : i32
    return %c0_i32, %c0_i32_0 : i32, i32
  }
  func.func @transform_6(%arg0: i32) -> (i32, i32) {
    %c0_i32 = arith.constant 0 : i32
    %c0_i32_0 = arith.constant 0 : i32
    return %arg0, %c0_i32 : i32, i32
  }
}

</mosaic_0001>

<llo_original>
// kernel: tpu_custom_call.1
$region0: #{tpu_custom_call.1}
  #allocation0 [shape = 'u32[]', space=smem, size = 0x4, offset = 0x4, fixed_abs, tag = 'smem constant byte address 0x4 - core index']
  #allocation1 [shape = 'u32[144,128]{1,0:T(1,128)}', space=vmem, size = 0x12000, scoped, tag = 'internal scratch']
  %s0 = inlined_call_operand.hbm [shape: bf16[32,64], index: 0, kind: input, shape index: {}]
  %s1 = inlined_call_operand.hbm [shape: bf16[64,64], index: 1, kind: input, shape index: {}]
  %s2 = inlined_call_operand.hbm [shape: bf16[64,64], index: 2, kind: input, shape index: {}]
  %s3 = inlined_call_operand.hbm [shape: bf16[64,64], index: 3, kind: input, shape index: {}]
  %s4 = inlined_call_operand.hbm [shape: bf16[64,64], index: 4, kind: input, shape index: {}]
  %s5 = inlined_call_operand.vmem [shape: f32[1,64], index: 5, kind: input, shape index: {}]
  %s6 = inlined_call_operand.hbm [shape: f32[32,64], index: 6, kind: output, shape index: {}]
  %s7 = sld [smem:[#allocation0]]
  $region77: #{tpu_custom_call.1} parent=0
    _
  %s9 = ssub.s32 1, %s7
  %s10 = scalar_select 0, %s9, %s7
  $region1: #{tpu_custom_call.1} parent=0
    #allocation2 [shape = 'u8[8192]{0}', space=vmem, size = 0x2000, scoped, tag = 'input window, operand 0']
    #allocation3 [shape = 's32[2]{0}', space=sflag, size = 0x8, scoped, tag = 'scoped memory for tpu_custom_call.1']
    #allocation4 [shape = 's32[2]{0}', space=sflag, size = 0x8, scoped, tag = 'scoped memory for tpu_custom_call.1']
    #allocation5 [shape = 'u8[16384]{0}', space=vmem, size = 0x4000, scoped, tag = 'input window, operand 1, single buffered']
    #allocation6 [shape = 's32[1]{0}', space=sflag, size = 0x4, scoped, tag = 'scoped memory for tpu_custom_call.1']
    #allocation7 [shape = 'u8[16384]{0}', space=vmem, size = 0x4000, scoped, tag = 'input window, operand 2, single buffered']
    #allocation8 [shape = 'u8[16384]{0}', space=vmem, size = 0x4000, scoped, tag = 'input window, operand 3, single buffered']
    #allocation9 [shape = 's32[1]{0}', space=sflag, size = 0x4, scoped, tag = 'scoped memory for tpu_custom_call.1']
    #allocation10 [shape = 'u8[16384]{0}', space=vmem, size = 0x4000, scoped, tag = 'input window, operand 4, single buffered']
    #allocation11 [shape = 'u8[16384]{0}', space=vmem, size = 0x4000, scoped, tag = 'output window, operand 0']
    %11 = vsyncpa [#allocation3], 0
    %s12 = scalar_lea.sflag [#allocation3], 1
    %13 = vsyncpa %s12, 0
    %14 = vsyncpa [#allocation6], 0
    %15 = vsyncpa [#allocation9], 0
    %16 = vsyncpa [#allocation4], 0
    %s17 = scalar_lea.sflag [#allocation4], 1
    %18 = vsyncpa %s17, 0
    loop: start=0, step=1, limit=4
    $region2: #{tpu_custom_call.1} parent=1 // loop_pre_header
      _
    $region3: #{tpu_custom_call.1} parent=1 // loop_header
      %s20 = sphi 0, %s24
      %p21 = scmp.ge.s32.totalorder %s20, 4
      %s30 = sphi 0, %s32
      %s33 = sphi 0, %s30
      %s34 = sphi 0, %s33
      %s50 = sphi 0, %s34
      %s54 = sphi 0, %s54
      %s56 = sphi 0, %s54
      %s57 = sphi 0, %s56
      %s71 = sphi 0, %s57
      %s75 = sphi 0, %s75
      %s77 = sphi 0, %s75
      %s78 = sphi 0, %s77
      %s92 = sphi 0, %s78
      %s96 = sphi 0, %s96
      %s98 = sphi 0, %s96
      %s99 = sphi 0, %s98
      %s113 = sphi 0, %s99
      %s117 = sphi 0, %s117
      %s119 = sphi 0, %s117
      %s120 = sphi 0, %s119
      %s134 = sphi 0, %s120
      %s138 = sphi 0, %s138
      %s140 = sphi 0, %s138
      %s141 = sphi 0, %s140
      %s155 = sphi 0, %s141
      %s161 = sphi 0, %s163
      %s164 = sphi 0, %s161
      %s165 = sphi 0, %s164
      %s181 = sphi 0, %s165
    $region4: #{tpu_custom_call.1} parent=1 // loop_header_branch
      %23 = sbr.rel (%p21) target = $region8
    $region5: #{tpu_custom_call.1} parent=1 // loop_body
      %s25 = ssub.s32 %s20, 1
      %s26 = ssub.s32 %s20, 2
      %s27 = sadd.s32 %s20, 1
      %s28 = ssub.s32 %s20, %s27
      %p29 = scmp.eq.s32.totalorder %s28, 0
      %s31 = sadd.s32 %s30, 1
      %s32 = scalar_select %p29, %s30, %s31
      %p35 = pneg %p29
      %p36 = scmp.eq.s32.totalorder %s20, 1
      %p37 = por %p35, %p36
      %p38 = scmp.ne.s32.totalorder %s30, %s33
      %p39 = scmp.eq.s32.totalorder %s20, 0
      %p40 = por %p38, %p39
      %p41 = scmp.ne.s32.totalorder %s30, %s33
      %p42 = scmp.eq.s32.totalorder %s25, 1
      %p43 = por %p41, %p42
      %p44 = scmp.ne.s32.totalorder %s33, %s34
      %p45 = scmp.eq.s32.totalorder %s25, 0
      %p46 = por %p44, %p45
      %p47 = scmp.ne.s32.totalorder %s33, %s34
      %p48 = scmp.eq.s32.totalorder %s26, 1
      %p49 = por %p47, %p48
      %p51 = scmp.ne.s32.totalorder %s34, %s50
      %p52 = scmp.eq.s32.totalorder %s26, 0
      %p53 = por %p51, %p52
      %s55 = sadd.s32 %s54, 1
      %p58 = scmp.eq.s32.totalorder %s20, 1
      %p59 = scmp.ne.s32.totalorder %s54, %s56
      %p60 = scmp.eq.s32.totalorder %s20, 0
      %p61 = por %p59, %p60
      %p62 = scmp.ne.s32.totalorder %s54, %s56
      %p63 = scmp.eq.s32.totalorder %s25, 1
      %p64 = por %p62, %p63
      %p65 = scmp.ne.s32.totalorder %s56, %s57
      %p66 = scmp.eq.s32.totalorder %s25, 0
      %p67 = por %p65, %p66
      %p68 = scmp.ne.s32.totalorder %s56, %s57
      %p69 = scmp.eq.s32.totalorder %s26, 1
      %p70 = por %p68, %p69
      %p72 = scmp.ne.s32.totalorder %s57, %s71
      %p73 = scmp.eq.s32.totalorder %s26, 0
      %p74 = por %p72, %p73
      %s76 = sadd.s32 %s75, 1
      %p79 = scmp.eq.s32.totalorder %s20, 1
      %p80 = scmp.ne.s32.totalorder %s75, %s77
      %p81 = scmp.eq.s32.totalorder %s20, 0
      %p82 = por %p80, %p81
      %p83 = scmp.ne.s32.totalorder %s75, %s77
      %p84 = scmp.eq.s32.totalorder %s25, 1
      %p85 = por %p83, %p84
      %p86 = scmp.ne.s32.totalorder %s77, %s78
      %p87 = scmp.eq.s32.totalorder %s25, 0
      %p88 = por %p86, %p87
      %p89 = scmp.ne.s32.totalorder %s77, %s78
      %p90 = scmp.eq.s32.totalorder %s26, 1
      %p91 = por %p89, %p90
      %p93 = scmp.ne.s32.totalorder %s78, %s92
      %p94 = scmp.eq.s32.totalorder %s26, 0
      %p95 = por %p93, %p94
      %s97 = sadd.s32 %s96, 1
      %p100 = scmp.eq.s32.totalorder %s20, 1
      %p101 = scmp.ne.s32.totalorder %s96, %s98
      %p102 = scmp.eq.s32.totalorder %s20, 0
      %p103 = por %p101, %p102
      %p104 = scmp.ne.s32.totalorder %s96, %s98
      %p105 = scmp.eq.s32.totalorder %s25, 1
      %p106 = por %p104, %p105
      %p107 = scmp.ne.s32.totalorder %s98, %s99
      %p108 = scmp.eq.s32.totalorder %s25, 0
      %p109 = por %p107, %p108
      %p110 = scmp.ne.s32.totalorder %s98, %s99
      %p111 = scmp.eq.s32.totalorder %s26, 1
      %p112 = por %p110, %p111
      %p114 = scmp.ne.s32.totalorder %s99, %s113
      %p115 = scmp.eq.s32.totalorder %s26, 0
      %p116 = por %p114, %p115
      %s118 = sadd.s32 %s117, 1
      %p121 = scmp.eq.s32.totalorder %s20, 1
      %p122 = scmp.ne.s32.totalorder %s117, %s119
      %p123 = scmp.eq.s32.totalorder %s20, 0
      %p124 = por %p122, %p123
      %p125 = scmp.ne.s32.totalorder %s117, %s119
      %p126 = scmp.eq.s32.totalorder %s25, 1
      %p127 = por %p125, %p126
      %p128 = scmp.ne.s32.totalorder %s119, %s120
      %p129 = scmp.eq.s32.totalorder %s25, 0
      %p130 = por %p128, %p129
      %p131 = scmp.ne.s32.totalorder %s119, %s120
      %p132 = scmp.eq.s32.totalorder %s26, 1
      %p133 = por %p131, %p132
      %p135 = scmp.ne.s32.totalorder %s120, %s134
      %p136 = scmp.eq.s32.totalorder %s26, 0
      %p137 = por %p135, %p136
      %s139 = sadd.s32 %s138, 1
      %p142 = scmp.eq.s32.totalorder %s20, 1
      %p143 = scmp.ne.s32.totalorder %s138, %s140
      %p144 = scmp.eq.s32.totalorder %s20, 0
      %p145 = por %p143, %p144
      %p146 = scmp.ne.s32.totalorder %s138, %s140
      %p147 = scmp.eq.s32.totalorder %s25, 1
      %p148 = por %p146, %p147
      %p149 = scmp.ne.s32.totalorder %s140, %s141
      %p150 = scmp.eq.s32.totalorder %s25, 0
      %p151 = por %p149, %p150
      %p152 = scmp.ne.s32.totalorder %s140, %s141
      %p153 = scmp.eq.s32.totalorder %s26, 1
      %p154 = por %p152, %p153
      %p156 = scmp.ne.s32.totalorder %s141, %s155
      %p157 = scmp.eq.s32.totalorder %s26, 0
      %p158 = por %p156, %p157
      %s159 = ssub.s32 %s20, %s27
      %p160 = scmp.eq.s32.totalorder %s159, 0
      %s162 = sadd.s32 %s161, 1
      %s163 = scalar_select %p160, %s161, %s162
      %p166 = pneg %p160
      %p167 = scmp.eq.s32.totalorder %s20, 1
      %p168 = por %p166, %p167
      %p169 = scmp.ne.s32.totalorder %s161, %s164
      %p170 = scmp.eq.s32.totalorder %s20, 0
      %p171 = por %p169, %p170
      %p172 = scmp.ne.s32.totalorder %s161, %s164
      %p173 = scmp.eq.s32.totalorder %s25, 1
      %p174 = por %p172, %p173
      %p175 = scmp.ne.s32.totalorder %s164, %s165
      %p176 = scmp.eq.s32.totalorder %s25, 0
      %p177 = por %p175, %p176
      %p178 = scmp.ne.s32.totalorder %s164, %s165
      %p179 = scmp.eq.s32.totalorder %s26, 1
      %p180 = por %p178, %p179
      %p182 = scmp.ne.s32.totalorder %s165, %s181
      %p183 = scmp.eq.s32.totalorder %s26, 0
      %p184 = por %p182, %p183
      %p185 = scmp.le.s32.totalorder 1, %s20
      %p186 = scmp.lt.s32.totalorder %s20, 3
      %p187 = pnand %p185, %p186
      %p188 = pneg %p187
      // Predicated region
      $region9: #{tpu_custom_call.1} parent=5 // pred_check
        _
      $region10: #{tpu_custom_call.1} parent=5 // pred_check_branch
        %190 = sbr.rel (%p187) target = $region12
      $region11: #{tpu_custom_call.1} parent=5 // pred_region
        %s191 = ssub.s32 %s20, 1
        // Predicated region
        $region13: #{tpu_custom_call.1} parent=11 // pred_check
          %p192 = pneg %p67
        $region14: #{tpu_custom_call.1} parent=11 // pred_check_branch
          %194 = sbr.rel (%p192) target = $region16
        $region15: #{tpu_custom_call.1} parent=11 // pred_region
          %s196 = ssub.s32 512, 512
          %197 = vsyncadd [#allocation6], %s196
          %s198 = sshll.u32 [#allocation5], 4
          %s199 = int_to_ptr.vmem [resolvable:$true] %s198
          %204 = dma.hbm_to_vmem [thread:$0]  %s1, 512, %s199, [#allocation6], 64, 64, 4
        $region16: #{tpu_custom_call.1} parent=11 // pred_fallthru
          _
        // Predicated region
        $region17: #{tpu_custom_call.1} parent=11 // pred_check
          %p205 = pneg %p88
        $region18: #{tpu_custom_call.1} parent=11 // pred_check_branch
          %207 = sbr.rel (%p205) target = $region20
        $region19: #{tpu_custom_call.1} parent=11 // pred_region
          %s209 = ssub.s32 512, 512
          %210 = vsyncadd [#allocation6], %s209
          %s211 = sshll.u32 [#allocation7], 4
          %s212 = int_to_ptr.vmem [resolvable:$true] %s211
          %217 = dma.hbm_to_vmem [thread:$0]  %s2, 512, %s212, [#allocation6], 64, 64, 4
        $region20: #{tpu_custom_call.1} parent=11 // pred_fallthru
          _
        // Predicated region
        $region21: #{tpu_custom_call.1} parent=11 // pred_check
          %p218 = pneg %p109
        $region22: #{tpu_custom_call.1} parent=11 // pred_check_branch
          %220 = sbr.rel (%p218) target = $region24
        $region23: #{tpu_custom_call.1} parent=11 // pred_region
          %s222 = ssub.s32 512, 512
          %223 = vsyncadd [#allocation9], %s222
          %s224 = sshll.u32 [#allocation8], 4
          %s225 = int_to_ptr.vmem [resolvable:$true] %s224
          %230 = dma.hbm_to_vmem [thread:$0]  %s3, 512, %s225, [#allocation9], 64, 64, 4
        $region24: #{tpu_custom_call.1} parent=11 // pred_fallthru
          _
        // Predicated region
        $region25: #{tpu_custom_call.1} parent=11 // pred_check
          %p231 = pneg %p130
        $region26: #{tpu_custom_call.1} parent=11 // pred_check_branch
          %233 = sbr.rel (%p231) target = $region28
        $region27: #{tpu_custom_call.1} parent=11 // pred_region
          %s235 = ssub.s32 512, 512
          %236 = vsyncadd [#allocation9], %s235
          %s237 = sshll.u32 [#allocation10], 4
          %s238 = int_to_ptr.vmem [resolvable:$true] %s237
          %243 = dma.hbm_to_vmem [thread:$0]  %s4, 512, %s238, [#allocation9], 64, 64, 4
        $region28: #{tpu_custom_call.1} parent=11 // pred_fallthru
          _
        // Predicated region
        $region29: #{tpu_custom_call.1} parent=11 // pred_check
          %p244 = pneg %p151
        $region30: #{tpu_custom_call.1} parent=11 // pred_check_branch
          %246 = sbr.rel (%p244) target = $region32
        $region31: #{tpu_custom_call.1} parent=11 // pred_region
          _
        $region32: #{tpu_custom_call.1} parent=11 // pred_fallthru
          _
      $region12: #{tpu_custom_call.1} parent=5 // pred_fallthru
        _
      %p247 = scmp.lt.s32.totalorder %s20, 2
      // Predicated region
      $region33: #{tpu_custom_call.1} parent=5 // pred_check
        %p248 = pneg %p247
      $region34: #{tpu_custom_call.1} parent=5 // pred_check_branch
        %250 = sbr.rel (%p248) target = $region36
      $region35: #{tpu_custom_call.1} parent=5 // pred_region
        // Predicated region
        $region37: #{tpu_custom_call.1} parent=35 // pred_check
          %p251 = pneg %p40
        $region38: #{tpu_custom_call.1} parent=35 // pred_check_branch
          %253 = sbr.rel (%p251) target = $region40
        $region39: #{tpu_custom_call.1} parent=35 // pred_region
          %s254 = sand.u32 %s30, 1
          %s255 = scalar_lea.sflag [#allocation3], %s254
          %s256 = sand.u32 %s30, 1
          %s257 = smul.addr %s256, 8
          %s258 = scalar_lea.vmem [#allocation2], %s257
          %s259 = smul.u32 2, %s20
          %s261 = ssub.s32 128, 128
          %262 = vsyncadd %s255, %s261
          %s263 = smul.addr %s259, 64
          %s264 = scalar_lea.hbm %s0, %s263
          %s265 = sshll.u32 %s258, 4
          %s266 = int_to_ptr.vmem [resolvable:$true] %s265
          %271 = dma.hbm_to_vmem [thread:$0]  %s264, 128, %s266, %s255, 64, 64, 4
        $region40: #{tpu_custom_call.1} parent=35 // pred_fallthru
          _
      $region36: #{tpu_custom_call.1} parent=5 // pred_fallthru
        _
      %p272 = scmp.le.s32.totalorder 1, %s20
      %p273 = scmp.lt.s32.totalorder %s20, 3
      %p274 = pnand %p272, %p273
      %p275 = pneg %p274
      // Predicated region
      $region41: #{tpu_custom_call.1} parent=5 // pred_check
        _
      $region42: #{tpu_custom_call.1} parent=5 // pred_check_branch
        %277 = sbr.rel (%p274) target = $region44
      $region43: #{tpu_custom_call.1} parent=5 // pred_region
        %s278 = ssub.s32 %s20, 1
        %s279 = sand.u32 %s33, 1
        %s280 = scalar_lea.sflag [#allocation3], %s279
        %s281 = sand.u32 %s33, 1
        %s282 = smul.addr %s281, 8
        %s283 = scalar_lea.vmem [#allocation2], %s282
        // Predicated region
        $region45: #{tpu_custom_call.1} parent=43 // pred_check
          %p284 = pneg %p46
        $region46: #{tpu_custom_call.1} parent=43 // pred_check_branch
          %286 = sbr.rel (%p284) target = $region48
        $region47: #{tpu_custom_call.1} parent=43 // pred_region
          %287 = dma.done %s280, 128
        $region48: #{tpu_custom_call.1} parent=43 // pred_fallthru
          _
        // Predicated region
        $region49: #{tpu_custom_call.1} parent=43 // pred_check
          %p288 = pneg %p67
        $region50: #{tpu_custom_call.1} parent=43 // pred_check_branch
          %290 = sbr.rel (%p288) target = $region52
        $region51: #{tpu_custom_call.1} parent=43 // pred_region
          %291 = dma.done [#allocation6], 512
        $region52: #{tpu_custom_call.1} parent=43 // pred_fallthru
          _
        // Predicated region
        $region53: #{tpu_custom_call.1} parent=43 // pred_check
          %p292 = pneg %p88
        $region54: #{tpu_custom_call.1} parent=43 // pred_check_branch
          %294 = sbr.rel (%p292) target = $region56
        $region55: #{tpu_custom_call.1} parent=43 // pred_region
          %295 = dma.done [#allocation6], 512
        $region56: #{tpu_custom_call.1} parent=43 // pred_fallthru
          _
        // Predicated region
        $region57: #{tpu_custom_call.1} parent=43 // pred_check
          %p296 = pneg %p109
        $region58: #{tpu_custom_call.1} parent=43 // pred_check_branch
          %298 = sbr.rel (%p296) target = $region60
        $region59: #{tpu_custom_call.1} parent=43 // pred_region
          %299 = dma.done [#allocation9], 512
        $region60: #{tpu_custom_call.1} parent=43 // pred_fallthru
          _
        // Predicated region
        $region61: #{tpu_custom_call.1} parent=43 // pred_check
          %p300 = pneg %p130
        $region62: #{tpu_custom_call.1} parent=43 // pred_check_branch
          %302 = sbr.rel (%p300) target = $region64
        $region63: #{tpu_custom_call.1} parent=43 // pred_region
          %303 = dma.done [#allocation9], 512
        $region64: #{tpu_custom_call.1} parent=43 // pred_fallthru
          _
        %s304 = sand.u32 %s33, 1
        %s305 = scalar_lea.sflag [#allocation3], %s304
        %s306 = sand.u32 %s33, 1
        %s307 = smul.addr %s306, 8
        %s308 = scalar_lea.vmem [#allocation2], %s307
        %p309 = pneg %p46
        %p310 = pneg %p43
        %p311 = pneg %p67
        %p312 = pneg %p64
        %p313 = pneg %p88
        %p314 = pneg %p85
        %p315 = pneg %p109
        %p316 = pneg %p106
        %p317 = pneg %p130
        %p318 = pneg %p127
        %p319 = pneg %p151
        %p320 = pneg %p148
        %p321 = pneg %p177
        %p322 = pneg %p174
        %s323 = sand.u32 %s164, 1
        %s324 = scalar_lea.sflag [#allocation4], %s323
        %s325 = sand.u32 %s164, 1
        %s326 = smul.addr %s325, 16
        %s327 = scalar_lea.vmem [#allocation11], %s326
        %s328 = smul.u32 2, %s25
        %s329 = smul.u32 2, %s25
        %v331 = vld [vmem:[%s283] sm:$0xf]
        %v332 = vld [vmem:[%s283 + $0x4] sm:$0xf]
        %v333 = vld [vmem:[#allocation5] sm:$0xf]
        %v334 = vld [vmem:[#allocation5 + $0x4] sm:$0xf]
        %v335 = vld [vmem:[#allocation5 + $0x8] sm:$0xf]
        %v336 = vld [vmem:[#allocation5 + $0xc] sm:$0xf]
        %v337 = vld [vmem:[#allocation5 + $0x10] sm:$0xf]
        %v338 = vld [vmem:[#allocation5 + $0x14] sm:$0xf]
        %v339 = vld [vmem:[#allocation5 + $0x18] sm:$0xf]
        %v340 = vld [vmem:[#allocation5 + $0x1c] sm:$0xf]
        %v343 = vunpack.c.l.b16 %v331
        %v344 = vunpack.c.l.b16 %v332
        %v345 = vpack.c.b16 %v344, %v343
        %v354 = vunpack.c.l.b16 %v333
        %v355 = vunpack.c.l.b16 %v334
        %v356 = vunpack.c.l.b16 %v335
        %v357 = vunpack.c.l.b16 %v336
        %v358 = vunpack.c.l.b16 %v337
        %v359 = vunpack.c.l.b16 %v338
        %v360 = vunpack.c.l.b16 %v339
        %v361 = vunpack.c.l.b16 %v340
        %v362 = vpack.c.b16 %v355, %v354
        %v363 = vpack.c.b16 %v357, %v356
        %v364 = vpack.c.b16 %v359, %v358
        %v365 = vpack.c.b16 %v361, %v360
        %vm370 = vcmask 523264
        %v372 = vsel %vm370, %v345, 0
        %374 = vmatprep.subr.bf16.mxu0 0
        %375 = vmatpush1.bf16.msra.mxu0 %v362
        %376 = vmatprep.subr.bf16.mxu0 0
        %377 = vmatpush1.bf16.msra.mxu0 %v363
        %378 = vmatprep.subr.bf16.mxu0 0
        %379 = vmatpush1.bf16.msra.mxu0 %v364
        %380 = vmatprep.subr.bf16.mxu0 0
        %381 = vmatpush1.bf16.msra.mxu0 %v365
        %382 = vmatprep.subr.bf16.mxu0 0
        %383 = vmatpush1.bf16.msra.mxu0 0
        %384 = vmatprep.subr.bf16.mxu0 0
        %385 = vmatpush1.bf16.msra.mxu0 0
        %386 = vmatprep.subr.bf16.mxu0 0
        %387 = vmatpush1.bf16.msra.mxu0 0
        %388 = vmatprep.subr.bf16.mxu0 0
        %389 = vmatpush1.bf16.msra.mxu0 0
        %390 = vmatprep.subr.bf16.mxu0 0
        %391 = vmatpush1.bf16.msra.mxu0 0
        %392 = vmatprep.subr.bf16.mxu0 0
        %393 = vmatpush1.bf16.msra.mxu0 0
        %394 = vmatprep.subr.bf16.mxu0 0
        %395 = vmatpush1.bf16.msra.mxu0 0
        %396 = vmatprep.subr.bf16.mxu0 0
        %397 = vmatpush1.bf16.msra.mxu0 0
        %398 = vmatprep.subr.bf16.mxu0 0
        %399 = vmatpush1.bf16.msra.mxu0 0
        %400 = vmatprep.subr.bf16.mxu0 0
        %401 = vmatpush1.bf16.msra.mxu0 0
        %402 = vmatprep.subr.bf16.mxu0 0
        %403 = vmatpush1.bf16.msra.mxu0 0
        %404 = vmatprep.subr.bf16.mxu0 0
        %405 = vmatpush1.bf16.msra.mxu0 0
        %406 = vmatprep.mubr.bf16.mxu0 0
        %407 = vmatmul.mubr.bf16.gmra.mrb[0].mxu0 %v372
        %v408 = vpop.f32.mrb[0].mxu0
        %v409 = vadd.f32 0.0, %v408
        %v410 = vpop.f32.mrb[0].mxu0
        %v411 = vpop.f32.mrb[0].mxu0
        %v412 = vadd.f32 0.0, %v411
        %v413 = vpop.f32.mrb[0].mxu0
        %414 = vdwg.mxu0
        %v415 = vpack.c.bf16 %v412, %v409
        %v416 = vld [vmem:[#allocation7] sm:$0xf]
        %v417 = vld [vmem:[#allocation7 + $0x4] sm:$0xf]
        %v418 = vld [vmem:[#allocation7 + $0x8] sm:$0xf]
        %v419 = vld [vmem:[#allocation7 + $0xc] sm:$0xf]
        %v420 = vld [vmem:[#allocation7 + $0x10] sm:$0xf]
        %v421 = vld [vmem:[#allocation7 + $0x14] sm:$0xf]
        %v422 = vld [vmem:[#allocation7 + $0x18] sm:$0xf]
        %v423 = vld [vmem:[#allocation7 + $0x1c] sm:$0xf]
        %v432 = vunpack.c.l.b16 %v416
        %v433 = vunpack.c.l.b16 %v417
        %v434 = vunpack.c.l.b16 %v418
        %v435 = vunpack.c.l.b16 %v419
        %v436 = vunpack.c.l.b16 %v420
        %v437 = vunpack.c.l.b16 %v421
        %v438 = vunpack.c.l.b16 %v422
        %v439 = vunpack.c.l.b16 %v423
        %v440 = vpack.c.b16 %v433, %v432
        %v441 = vpack.c.b16 %v435, %v434
        %v442 = vpack.c.b16 %v437, %v436
        %v443 = vpack.c.b16 %v439, %v438
        %448 = vmatprep.subr.bf16.mxu0 0
        %449 = vmatpush1.bf16.msra.mxu0 %v440
        %450 = vmatprep.subr.bf16.mxu0 0
        %451 = vmatpush1.bf16.msra.mxu0 %v441
        %452 = vmatprep.subr.bf16.mxu0 0
        %453 = vmatpush1.bf16.msra.mxu0 %v442
        %454 = vmatprep.subr.bf16.mxu0 0
        %455 = vmatpush1.bf16.msra.mxu0 %v443
        %456 = vmatprep.subr.bf16.mxu0 0
        %457 = vmatpush1.bf16.msra.mxu0 0
        %458 = vmatprep.subr.bf16.mxu0 0
        %459 = vmatpush1.bf16.msra.mxu0 0
        %460 = vmatprep.subr.bf16.mxu0 0
        %461 = vmatpush1.bf16.msra.mxu0 0
        %462 = vmatprep.subr.bf16.mxu0 0
        %463 = vmatpush1.bf16.msra.mxu0 0
        %464 = vmatprep.subr.bf16.mxu0 0
        %465 = vmatpush1.bf16.msra.mxu0 0
        %466 = vmatprep.subr.bf16.mxu0 0
        %467 = vmatpush1.bf16.msra.mxu0 0
        %468 = vmatprep.subr.bf16.mxu0 0
        %469 = vmatpush1.bf16.msra.mxu0 0
        %470 = vmatprep.subr.bf16.mxu0 0
        %471 = vmatpush1.bf16.msra.mxu0 0
        %472 = vmatprep.subr.bf16.mxu0 0
        %473 = vmatpush1.bf16.msra.mxu0 0
        %474 = vmatprep.subr.bf16.mxu0 0
        %475 = vmatpush1.bf16.msra.mxu0 0
        %476 = vmatprep.subr.bf16.mxu0 0
        %477 = vmatpush1.bf16.msra.mxu0 0
        %478 = vmatprep.subr.bf16.mxu0 0
        %479 = vmatpush1.bf16.msra.mxu0 0
        %480 = vmatprep.mubr.bf16.mxu0 0
        %481 = vmatmul.mubr.bf16.gmra.mrb[0].mxu0 %v372
        %v482 = vpop.f32.mrb[0].mxu0
        %v483 = vadd.f32 0.0, %v482
        %v484 = vpop.f32.mrb[0].mxu0
        %v485 = vpop.f32.mrb[0].mxu0
        %v486 = vadd.f32 0.0, %v485
        %v487 = vpop.f32.mrb[0].mxu0
        %488 = vdwg.mxu0
        %v489 = vpack.c.bf16 %v486, %v483
        %v490 = vld [vmem:[#allocation8] sm:$0xf]
        %v491 = vld [vmem:[#allocation8 + $0x4] sm:$0xf]
        %v492 = vld [vmem:[#allocation8 + $0x8] sm:$0xf]
        %v493 = vld [vmem:[#allocation8 + $0xc] sm:$0xf]
        %v494 = vld [vmem:[#allocation8 + $0x10] sm:$0xf]
        %v495 = vld [vmem:[#allocation8 + $0x14] sm:$0xf]
        %v496 = vld [vmem:[#allocation8 + $0x18] sm:$0xf]
        %v497 = vld [vmem:[#allocation8 + $0x1c] sm:$0xf]
        %v506 = vunpack.c.l.b16 %v490
        %v507 = vunpack.c.l.b16 %v491
        %v508 = vunpack.c.l.b16 %v492
        %v509 = vunpack.c.l.b16 %v493
        %v510 = vunpack.c.l.b16 %v494
        %v511 = vunpack.c.l.b16 %v495
        %v512 = vunpack.c.l.b16 %v496
        %v513 = vunpack.c.l.b16 %v497
        %v514 = vpack.c.b16 %v507, %v506
        %v515 = vpack.c.b16 %v509, %v508
        %v516 = vpack.c.b16 %v511, %v510
        %v517 = vpack.c.b16 %v513, %v512
        %522 = vmatprep.subr.bf16.mxu0 0
        %523 = vmatpush1.bf16.msra.mxu0 %v514
        %524 = vmatprep.subr.bf16.mxu0 0
        %525 = vmatpush1.bf16.msra.mxu0 %v515
        %526 = vmatprep.subr.bf16.mxu0 0
        %527 = vmatpush1.bf16.msra.mxu0 %v516
        %528 = vmatprep.subr.bf16.mxu0 0
        %529 = vmatpush1.bf16.msra.mxu0 %v517
        %530 = vmatprep.subr.bf16.mxu0 0
        %531 = vmatpush1.bf16.msra.mxu0 0
        %532 = vmatprep.subr.bf16.mxu0 0
        %533 = vmatpush1.bf16.msra.mxu0 0
        %534 = vmatprep.subr.bf16.mxu0 0
        %535 = vmatpush1.bf16.msra.mxu0 0
        %536 = vmatprep.subr.bf16.mxu0 0
        %537 = vmatpush1.bf16.msra.mxu0 0
        %538 = vmatprep.subr.bf16.mxu0 0
        %539 = vmatpush1.bf16.msra.mxu0 0
        %540 = vmatprep.subr.bf16.mxu0 0
        %541 = vmatpush1.bf16.msra.mxu0 0
        %542 = vmatprep.subr.bf16.mxu0 0
        %543 = vmatpush1.bf16.msra.mxu0 0
        %544 = vmatprep.subr.bf16.mxu0 0
        %545 = vmatpush1.bf16.msra.mxu0 0
        %546 = vmatprep.subr.bf16.mxu0 0
        %547 = vmatpush1.bf16.msra.mxu0 0
        %548 = vmatprep.subr.bf16.mxu0 0
        %549 = vmatpush1.bf16.msra.mxu0 0
        %550 = vmatprep.subr.bf16.mxu0 0
        %551 = vmatpush1.bf16.msra.mxu0 0
        %552 = vmatprep.subr.bf16.mxu0 0
        %553 = vmatpush1.bf16.msra.mxu0 0
        %554 = vmatprep.mubr.bf16.mxu0 0
        %555 = vmatmul.mubr.bf16.gmra.mrb[0].mxu0 %v372
        %v556 = vpop.f32.mrb[0].mxu0
        %v557 = vadd.f32 0.0, %v556
        %v558 = vpop.f32.mrb[0].mxu0
        %v559 = vpop.f32.mrb[0].mxu0
        %v560 = vadd.f32 0.0, %v559
        %v561 = vpop.f32.mrb[0].mxu0
        %562 = vdwg.mxu0
        %v563 = vpack.c.bf16 %v560, %v557
        %vm564 = vcmask 64512
        %v566 = vsel %vm564, %v415, 0
        %v569 = vsel %vm564, %v489, 0
        %571 = vmatprep.subr.bf16.mxu0 0
        %572 = vmatpush1.bf16.xpose.msra.mxu0 %v569
        %573 = vmatprep.subr.bf16.mxu0 0
        %574 = vmatpush1.bf16.xpose.msra.mxu0 0
        %575 = vmatprep.subr.bf16.mxu0 0
        %576 = vmatpush1.bf16.xpose.msra.mxu0 0
        %577 = vmatprep.subr.bf16.mxu0 0
        %578 = vmatpush1.bf16.xpose.msra.mxu0 0
        %579 = vmatprep.subr.bf16.mxu0 0
        %580 = vmatpush1.bf16.xpose.msra.mxu0 0
        %581 = vmatprep.subr.bf16.mxu0 0
        %582 = vmatpush1.bf16.xpose.msra.mxu0 0
        %583 = vmatprep.subr.bf16.mxu0 0
        %584 = vmatpush1.bf16.xpose.msra.mxu0 0
        %585 = vmatprep.subr.bf16.mxu0 0
        %586 = vmatpush1.bf16.xpose.msra.mxu0 0
        %587 = vmatprep.subr.bf16.mxu0 0
        %588 = vmatpush1.bf16.xpose.msra.mxu0 0
        %589 = vmatprep.subr.bf16.mxu0 0
        %590 = vmatpush1.bf16.xpose.msra.mxu0 0
        %591 = vmatprep.subr.bf16.mxu0 0
        %592 = vmatpush1.bf16.xpose.msra.mxu0 0
        %593 = vmatprep.subr.bf16.mxu0 0
        %594 = vmatpush1.bf16.xpose.msra.mxu0 0
        %595 = vmatprep.subr.bf16.mxu0 0
        %596 = vmatpush1.bf16.xpose.msra.mxu0 0
        %597 = vmatprep.subr.bf16.mxu0 0
        %598 = vmatpush1.bf16.xpose.msra.mxu0 0
        %599 = vmatprep.subr.bf16.mxu0 0
        %600 = vmatpush1.bf16.xpose.msra.mxu0 0
        %601 = vmatprep.subr.bf16.mxu0 0
        %602 = vmatpush1.bf16.xpose.msra.mxu0 0
        %603 = vmatprep.mubr.bf16.mxu0 0
        %604 = vmatmul.mubr.bf16.gmra.mrb[0].mxu0 %v566
        %v605 = vpop.f32.mrb[0].mxu0
        %v606 = vadd.f32 0.0, %v605
        %v607 = vpop.f32.mrb[0].mxu0
        %v608 = vpop.f32.mrb[0].mxu0
        %v609 = vadd.f32 0.0, %v608
        %v610 = vpop.f32.mrb[0].mxu0
        %611 = vdwg.mxu0
        %vm612 = vcmask 130048
        %v613 = vsel %vm612, %v606, -inf
        %614 = vmax.xlane.f32.xlu0 %v613
        %v615 = vpop.xlane.xlu0 %614
        %v616 = vsel %vm612, %v609, -inf
        %617 = vmax.xlane.f32.xlu0 %v616
        %v618 = vpop.xlane.xlu0 %617
        %v619 = vsub.f32 %v606, %v615
        %v620 = vsub.f32 %v609, %v618
        %v621 = vmul.f32 %v619, 1.442695
        %v622 = vpow.pop %v621
        %v623 = vmul.f32 %v620, 1.442695
        %v624 = vpow.pop %v623
        %v625 = vsel %vm612, %v622, 0.0
        %626 = vadd.xlane.f32.xlu0 %v625
        %v627 = vpop.xlane.xlu0 %626
        %v628 = vsel %vm612, %v624, 0.0
        %629 = vadd.xlane.f32.xlu0 %v628
        %v630 = vpop.xlane.xlu0 %629
        %v631 = vrcp.pop %v627
        %v632 = vrcp.pop %v630
        %v633 = vmul.f32 %v622, %v631
        %v634 = vmul.f32 %v624, %v632
        %v635 = vpack.c.bf16 %v634, %v633
        %v637 = vsel %vm612, %v635, 0
        %639 = vmatprep.subr.bf16.mxu0 0
        %640 = vmatpush1.bf16.msra.mxu0 %v563
        %641 = vmatprep.subr.bf16.mxu0 0
        %642 = vmatpush1.bf16.msra.mxu0 0
        %643 = vmatprep.subr.bf16.mxu0 0
        %644 = vmatpush1.bf16.msra.mxu0 0
        %645 = vmatprep.subr.bf16.mxu0 0
        %646 = vmatpush1.bf16.msra.mxu0 0
        %647 = vmatprep.subr.bf16.mxu0 0
        %648 = vmatpush1.bf16.msra.mxu0 0
        %649 = vmatprep.subr.bf16.mxu0 0
        %650 = vmatpush1.bf16.msra.mxu0 0
        %651 = vmatprep.subr.bf16.mxu0 0
        %652 = vmatpush1.bf16.msra.mxu0 0
        %653 = vmatprep.subr.bf16.mxu0 0
        %654 = vmatpush1.bf16.msra.mxu0 0
        %655 = vmatprep.subr.bf16.mxu0 0
        %656 = vmatpush1.bf16.msra.mxu0 0
        %657 = vmatprep.subr.bf16.mxu0 0
        %658 = vmatpush1.bf16.msra.mxu0 0
        %659 = vmatprep.subr.bf16.mxu0 0
        %660 = vmatpush1.bf16.msra.mxu0 0
        %661 = vmatprep.subr.bf16.mxu0 0
        %662 = vmatpush1.bf16.msra.mxu0 0
        %663 = vmatprep.subr.bf16.mxu0 0
        %664 = vmatpush1.bf16.msra.mxu0 0
        %665 = vmatprep.subr.bf16.mxu0 0
        %666 = vmatpush1.bf16.msra.mxu0 0
        %667 = vmatprep.subr.bf16.mxu0 0
        %668 = vmatpush1.bf16.msra.mxu0 0
        %669 = vmatprep.subr.bf16.mxu0 0
        %670 = vmatpush1.bf16.msra.mxu0 0
        %671 = vmatprep.mubr.bf16.mxu0 0
        %672 = vmatmul.mubr.bf16.gmra.mrb[0].mxu0 %v637
        %v673 = vpop.f32.mrb[0].mxu0
        %v674 = vadd.f32 0.0, %v673
        %v675 = vpop.f32.mrb[0].mxu0
        %v676 = vpop.f32.mrb[0].mxu0
        %v677 = vadd.f32 0.0, %v676
        %v678 = vpop.f32.mrb[0].mxu0
        %679 = vdwg.mxu0
        %v680 = vpack.c.bf16 %v677, %v674
        %682 = vrot.lane.b32.xlu0 %v415, 120
        %v683 = vpop.permute.xlu0 %682
        %685 = vrot.lane.b32.xlu0 %v489, 120
        %v686 = vpop.permute.xlu0 %685
        %v688 = vsel %vm564, %v683, 0
        %v691 = vsel %vm564, %v686, 0
        %693 = vmatprep.subr.bf16.mxu0 0
        %694 = vmatpush1.bf16.xpose.msra.mxu0 %v691
        %695 = vmatprep.subr.bf16.mxu0 0
        %696 = vmatpush1.bf16.xpose.msra.mxu0 0
        %697 = vmatprep.subr.bf16.mxu0 0
        %698 = vmatpush1.bf16.xpose.msra.mxu0 0
        %699 = vmatprep.subr.bf16.mxu0 0
        %700 = vmatpush1.bf16.xpose.msra.mxu0 0
        %701 = vmatprep.subr.bf16.mxu0 0
        %702 = vmatpush1.bf16.xpose.msra.mxu0 0
        %703 = vmatprep.subr.bf16.mxu0 0
        %704 = vmatpush1.bf16.xpose.msra.mxu0 0
        %705 = vmatprep.subr.bf16.mxu0 0
        %706 = vmatpush1.bf16.xpose.msra.mxu0 0
        %707 = vmatprep.subr.bf16.mxu0 0
        %708 = vmatpush1.bf16.xpose.msra.mxu0 0
        %709 = vmatprep.subr.bf16.mxu0 0
        %710 = vmatpush1.bf16.xpose.msra.mxu0 0
        %711 = vmatprep.subr.bf16.mxu0 0
        %712 = vmatpush1.bf16.xpose.msra.mxu0 0
        %713 = vmatprep.subr.bf16.mxu0 0
        %714 = vmatpush1.bf16.xpose.msra.mxu0 0
        %715 = vmatprep.subr.bf16.mxu0 0
        %716 = vmatpush1.bf16.xpose.msra.mxu0 0
        %717 = vmatprep.subr.bf16.mxu0 0
        %718 = vmatpush1.bf16.xpose.msra.mxu0 0
        %719 = vmatprep.subr.bf16.mxu0 0
        %720 = vmatpush1.bf16.xpose.msra.mxu0 0
        %721 = vmatprep.subr.bf16.mxu0 0
        %722 = vmatpush1.bf16.xpose.msra.mxu0 0
        %723 = vmatprep.subr.bf16.mxu0 0
        %724 = vmatpush1.bf16.xpose.msra.mxu0 0
        %725 = vmatprep.mubr.bf16.mxu0 0
        %726 = vmatmul.mubr.bf16.gmra.mrb[0].mxu0 %v688
        %v727 = vpop.f32.mrb[0].mxu0
        %v728 = vadd.f32 0.0, %v727
        %v729 = vpop.f32.mrb[0].mxu0
        %v730 = vpop.f32.mrb[0].mxu0
        %v731 = vadd.f32 0.0, %v730
        %v732 = vpop.f32.mrb[0].mxu0
        %733 = vdwg.mxu0
        %v734 = vsel %vm612, %v728, -inf
        %735 = vmax.xlane.f32.xlu0 %v734
        %v736 = vpop.xlane.xlu0 %735
        %v737 = vsel %vm612, %v731, -inf
        %738 = vmax.xlane.f32.xlu0 %v737
        %v739 = vpop.xlane.xlu0 %738
        %v740 = vsub.f32 %v728, %v736
        %v741 = vsub.f32 %v731, %v739
        %v742 = vmul.f32 %v740, 1.442695
        %v743 = vpow.pop %v742
        %v744 = vmul.f32 %v741, 1.442695
        %v745 = vpow.pop %v744
        %v746 = vsel %vm612, %v743, 0.0
        %747 = vadd.xlane.f32.xlu0 %v746
        %v748 = vpop.xlane.xlu0 %747
        %v749 = vsel %vm612, %v745, 0.0
        %750 = vadd.xlane.f32.xlu0 %v749
        %v751 = vpop.xlane.xlu0 %750
        %v752 = vrcp.pop %v748
        %v753 = vrcp.pop %v751
        %v754 = vmul.f32 %v743, %v752
        %v755 = vmul.f32 %v745, %v753
        %v756 = vpack.c.bf16 %v755, %v754
        %758 = vrot.lane.b32.xlu0 %v563, 120
        %v759 = vpop.permute.xlu0 %758
        %v762 = vsel %vm612, %v756, 0
        %764 = vmatprep.subr.bf16.mxu0 0
        %765 = vmatpush1.bf16.msra.mxu0 %v759
        %766 = vmatprep.subr.bf16.mxu0 0
        %767 = vmatpush1.bf16.msra.mxu0 0
        %768 = vmatprep.subr.bf16.mxu0 0
        %769 = vmatpush1.bf16.msra.mxu0 0
        %770 = vmatprep.subr.bf16.mxu0 0
        %771 = vmatpush1.bf16.msra.mxu0 0
        %772 = vmatprep.subr.bf16.mxu0 0
        %773 = vmatpush1.bf16.msra.mxu0 0
        %774 = vmatprep.subr.bf16.mxu0 0
        %775 = vmatpush1.bf16.msra.mxu0 0
        %776 = vmatprep.subr.bf16.mxu0 0
        %777 = vmatpush1.bf16.msra.mxu0 0
        %778 = vmatprep.subr.bf16.mxu0 0
        %779 = vmatpush1.bf16.msra.mxu0 0
        %780 = vmatprep.subr.bf16.mxu0 0
        %781 = vmatpush1.bf16.msra.mxu0 0
        %782 = vmatprep.subr.bf16.mxu0 0
        %783 = vmatpush1.bf16.msra.mxu0 0
        %784 = vmatprep.subr.bf16.mxu0 0
        %785 = vmatpush1.bf16.msra.mxu0 0
        %786 = vmatprep.subr.bf16.mxu0 0
        %787 = vmatpush1.bf16.msra.mxu0 0
        %788 = vmatprep.subr.bf16.mxu0 0
        %789 = vmatpush1.bf16.msra.mxu0 0
        %790 = vmatprep.subr.bf16.mxu0 0
        %791 = vmatpush1.bf16.msra.mxu0 0
        %792 = vmatprep.subr.bf16.mxu0 0
        %793 = vmatpush1.bf16.msra.mxu0 0
        %794 = vmatprep.subr.bf16.mxu0 0
        %795 = vmatpush1.bf16.msra.mxu0 0
        %796 = vmatprep.mubr.bf16.mxu0 0
        %797 = vmatmul.mubr.bf16.gmra.mrb[0].mxu0 %v762
        %v798 = vpop.f32.mrb[0].mxu0
        %v799 = vadd.f32 0.0, %v798
        %v800 = vpop.f32.mrb[0].mxu0
        %v801 = vpop.f32.mrb[0].mxu0
        %v802 = vadd.f32 0.0, %v801
        %v803 = vpop.f32.mrb[0].mxu0
        %804 = vdwg.mxu0
        %v805 = vpack.c.bf16 %v802, %v799
        %806 = vrot.lane.b32.xlu0 %v415, 112
        %v807 = vpop.permute.xlu0 %806
        %808 = vrot.lane.b32.xlu0 %v489, 112
        %v809 = vpop.permute.xlu0 %808
        %v811 = vsel %vm564, %v807, 0
        %v814 = vsel %vm564, %v809, 0
        %816 = vmatprep.subr.bf16.mxu0 0
        %817 = vmatpush1.bf16.xpose.msra.mxu0 %v814
        %818 = vmatprep.subr.bf16.mxu0 0
        %819 = vmatpush1.bf16.xpose.msra.mxu0 0
        %820 = vmatprep.subr.bf16.mxu0 0
        %821 = vmatpush1.bf16.xpose.msra.mxu0 0
        %822 = vmatprep.subr.bf16.mxu0 0
        %823 = vmatpush1.bf16.xpose.msra.mxu0 0
        %824 = vmatprep.subr.bf16.mxu0 0
        %825 = vmatpush1.bf16.xpose.msra.mxu0 0
        %826 = vmatprep.subr.bf16.mxu0 0
        %827 = vmatpush1.bf16.xpose.msra.mxu0 0
        %828 = vmatprep.subr.bf16.mxu0 0
        %829 = vmatpush1.bf16.xpose.msra.mxu0 0
        %830 = vmatprep.subr.bf16.mxu0 0
        %831 = vmatpush1.bf16.xpose.msra.mxu0 0
        %832 = vmatprep.subr.bf16.mxu0 0
        %833 = vmatpush1.bf16.xpose.msra.mxu0 0
        %834 = vmatprep.subr.bf16.mxu0 0
        %835 = vmatpush1.bf16.xpose.msra.mxu0 0
        %836 = vmatprep.subr.bf16.mxu0 0
        %837 = vmatpush1.bf16.xpose.msra.mxu0 0
        %838 = vmatprep.subr.bf16.mxu0 0
        %839 = vmatpush1.bf16.xpose.msra.mxu0 0
        %840 = vmatprep.subr.bf16.mxu0 0
        %841 = vmatpush1.bf16.xpose.msra.mxu0 0
        %842 = vmatprep.subr.bf16.mxu0 0
        %843 = vmatpush1.bf16.xpose.msra.mxu0 0
        %844 = vmatprep.subr.bf16.mxu0 0
        %845 = vmatpush1.bf16.xpose.msra.mxu0 0
        %846 = vmatprep.subr.bf16.mxu0 0
        %847 = vmatpush1.bf16.xpose.msra.mxu0 0
        %848 = vmatprep.mubr.bf16.mxu0 0
        %849 = vmatmul.mubr.bf16.gmra.mrb[0].mxu0 %v811
        %v850 = vpop.f32.mrb[0].mxu0
        %v851 = vadd.f32 0.0, %v850
        %v852 = vpop.f32.mrb[0].mxu0
        %v853 = vpop.f32.mrb[0].mxu0
        %v854 = vadd.f32 0.0, %v853
        %v855 = vpop.f32.mrb[0].mxu0
        %856 = vdwg.mxu0
        %v857 = vsel %vm612, %v851, -inf
        %858 = vmax.xlane.f32.xlu0 %v857
        %v859 = vpop.xlane.xlu0 %858
        %v860 = vsel %vm612, %v854, -inf
        %861 = vmax.xlane.f32.xlu0 %v860
        %v862 = vpop.xlane.xlu0 %861
        %v863 = vsub.f32 %v851, %v859
        %v864 = vsub.f32 %v854, %v862
        %v865 = vmul.f32 %v863, 1.442695
        %v866 = vpow.pop %v865
        %v867 = vmul.f32 %v864, 1.442695
        %v868 = vpow.pop %v867
        %v869 = vsel %vm612, %v866, 0.0
        %870 = vadd.xlane.f32.xlu0 %v869
        %v871 = vpop.xlane.xlu0 %870
        %v872 = vsel %vm612, %v868, 0.0
        %873 = vadd.xlane.f32.xlu0 %v872
        %v874 = vpop.xlane.xlu0 %873
        %v875 = vrcp.pop %v871
        %v876 = vrcp.pop %v874
        %v877 = vmul.f32 %v866, %v875
        %v878 = vmul.f32 %v868, %v876
        %v879 = vpack.c.bf16 %v878, %v877
        %880 = vrot.lane.b32.xlu0 %v563, 112
        %v881 = vpop.permute.xlu0 %880
        %v884 = vsel %vm612, %v879, 0
        %886 = vmatprep.subr.bf16.mxu0 0
        %887 = vmatpush1.bf16.msra.mxu0 %v881
        %888 = vmatprep.subr.bf16.mxu0 0
        %889 = vmatpush1.bf16.msra.mxu0 0
        %890 = vmatprep.subr.bf16.mxu0 0
        %891 = vmatpush1.bf16.msra.mxu0 0
        %892 = vmatprep.subr.bf16.mxu0 0
        %893 = vmatpush1.bf16.msra.mxu0 0
        %894 = vmatprep.subr.bf16.mxu0 0
        %895 = vmatpush1.bf16.msra.mxu0 0
        %896 = vmatprep.subr.bf16.mxu0 0
        %897 = vmatpush1.bf16.msra.mxu0 0
        %898 = vmatprep.subr.bf16.mxu0 0
        %899 = vmatpush1.bf16.msra.mxu0 0
        %900 = vmatprep.subr.bf16.mxu0 0
        %901 = vmatpush1.bf16.msra.mxu0 0
        %902 = vmatprep.subr.bf16.mxu0 0
        %903 = vmatpush1.bf16.msra.mxu0 0
        %904 = vmatprep.subr.bf16.mxu0 0
        %905 = vmatpush1.bf16.msra.mxu0 0
        %906 = vmatprep.subr.bf16.mxu0 0
        %907 = vmatpush1.bf16.msra.mxu0 0
        %908 = vmatprep.subr.bf16.mxu0 0
        %909 = vmatpush1.bf16.msra.mxu0 0
        %910 = vmatprep.subr.bf16.mxu0 0
        %911 = vmatpush1.bf16.msra.mxu0 0
        %912 = vmatprep.subr.bf16.mxu0 0
        %913 = vmatpush1.bf16.msra.mxu0 0
        %914 = vmatprep.subr.bf16.mxu0 0
        %915 = vmatpush1.bf16.msra.mxu0 0
        %916 = vmatprep.subr.bf16.mxu0 0
        %917 = vmatpush1.bf16.msra.mxu0 0
        %918 = vmatprep.mubr.bf16.mxu0 0
        %919 = vmatmul.mubr.bf16.gmra.mrb[0].mxu0 %v884
        %v920 = vpop.f32.mrb[0].mxu0
        %v921 = vadd.f32 0.0, %v920
        %v922 = vpop.f32.mrb[0].mxu0
        %v923 = vpop.f32.mrb[0].mxu0
        %v924 = vadd.f32 0.0, %v923
        %v925 = vpop.f32.mrb[0].mxu0
        %926 = vdwg.mxu0
        %v927 = vpack.c.bf16 %v924, %v921
        %928 = vrot.lane.b32.xlu0 %v415, 104
        %v929 = vpop.permute.xlu0 %928
        %930 = vrot.lane.b32.xlu0 %v489, 104
        %v931 = vpop.permute.xlu0 %930
        %v933 = vsel %vm564, %v929, 0
        %v936 = vsel %vm564, %v931, 0
        %938 = vmatprep.subr.bf16.mxu0 0
        %939 = vmatpush1.bf16.xpose.msra.mxu0 %v936
        %940 = vmatprep.subr.bf16.mxu0 0
        %941 = vmatpush1.bf16.xpose.msra.mxu0 0
        %942 = vmatprep.subr.bf16.mxu0 0
        %943 = vmatpush1.bf16.xpose.msra.mxu0 0
        %944 = vmatprep.subr.bf16.mxu0 0
        %945 = vmatpush1.bf16.xpose.msra.mxu0 0
        %946 = vmatprep.subr.bf16.mxu0 0
        %947 = vmatpush1.bf16.xpose.msra.mxu0 0
        %948 = vmatprep.subr.bf16.mxu0 0
        %949 = vmatpush1.bf16.xpose.msra.mxu0 0
        %950 = vmatprep.subr.bf16.mxu0 0
        %951 = vmatpush1.bf16.xpose.msra.mxu0 0
        %952 = vmatprep.subr.bf16.mxu0 0
        %953 = vmatpush1.bf16.xpose.msra.mxu0 0
        %954 = vmatprep.subr.bf16.mxu0 0
        %955 = vmatpush1.bf16.xpose.msra.mxu0 0
        %956 = vmatprep.subr.bf16.mxu0 0
        %957 = vmatpush1.bf16.xpose.msra.mxu0 0
        %958 = vmatprep.subr.bf16.mxu0 0
        %959 = vmatpush1.bf16.xpose.msra.mxu0 0
        %960 = vmatprep.subr.bf16.mxu0 0
        %961 = vmatpush1.bf16.xpose.msra.mxu0 0
        %962 = vmatprep.subr.bf16.mxu0 0
        %963 = vmatpush1.bf16.xpose.msra.mxu0 0
        %964 = vmatprep.subr.bf16.mxu0 0
        %965 = vmatpush1.bf16.xpose.msra.mxu0 0
        %966 = vmatprep.subr.bf16.mxu0 0
        %967 = vmatpush1.bf16.xpose.msra.mxu0 0
        %968 = vmatprep.subr.bf16.mxu0 0
        %969 = vmatpush1.bf16.xpose.msra.mxu0 0
        %970 = vmatprep.mubr.bf16.mxu0 0
        %971 = vmatmul.mubr.bf16.gmra.mrb[0].mxu0 %v933
        %v972 = vpop.f32.mrb[0].mxu0
        %v973 = vadd.f32 0.0, %v972
        %v974 = vpop.f32.mrb[0].mxu0
        %v975 = vpop.f32.mrb[0].mxu0
        %v976 = vadd.f32 0.0, %v975
        %v977 = vpop.f32.mrb[0].mxu0
        %978 = vdwg.mxu0
        %v979 = vsel %vm612, %v973, -inf
        %980 = vmax.xlane.f32.xlu0 %v979
        %v981 = vpop.xlane.xlu0 %980
        %v982 = vsel %vm612, %v976, -inf
        %983 = vmax.xlane.f32.xlu0 %v982
        %v984 = vpop.xlane.xlu0 %983
        %v985 = vsub.f32 %v973, %v981
        %v986 = vsub.f32 %v976, %v984
        %v987 = vmul.f32 %v985, 1.442695
        %v988 = vpow.pop %v987
        %v989 = vmul.f32 %v986, 1.442695
        %v990 = vpow.pop %v989
        %v991 = vsel %vm612, %v988, 0.0
        %992 = vadd.xlane.f32.xlu0 %v991
        %v993 = vpop.xlane.xlu0 %992
        %v994 = vsel %vm612, %v990, 0.0
        %995 = vadd.xlane.f32.xlu0 %v994
        %v996 = vpop.xlane.xlu0 %995
        %v997 = vrcp.pop %v993
        %v998 = vrcp.pop %v996
        %v999 = vmul.f32 %v988, %v997
        %v1000 = vmul.f32 %v990, %v998
        %v1001 = vpack.c.bf16 %v1000, %v999
        %1002 = vrot.lane.b32.xlu0 %v563, 104
        %v1003 = vpop.permute.xlu0 %1002
        %v1006 = vsel %vm612, %v1001, 0
        %1008 = vmatprep.subr.bf16.mxu0 0
        %1009 = vmatpush1.bf16.msra.mxu0 %v1003
        %1010 = vmatprep.subr.bf16.mxu0 0
        %1011 = vmatpush1.bf16.msra.mxu0 0
        %1012 = vmatprep.subr.bf16.mxu0 0
        %1013 = vmatpush1.bf16.msra.mxu0 0
        %1014 = vmatprep.subr.bf16.mxu0 0
        %1015 = vmatpush1.bf16.msra.mxu0 0
        %1016 = vmatprep.subr.bf16.mxu0 0
        %1017 = vmatpush1.bf16.msra.mxu0 0
        %1018 = vmatprep.subr.bf16.mxu0 0
        %1019 = vmatpush1.bf16.msra.mxu0 0
        %1020 = vmatprep.subr.bf16.mxu0 0
        %1021 = vmatpush1.bf16.msra.mxu0 0
        %1022 = vmatprep.subr.bf16.mxu0 0
        %1023 = vmatpush1.bf16.msra.mxu0 0
        %1024 = vmatprep.subr.bf16.mxu0 0
        %1025 = vmatpush1.bf16.msra.mxu0 0
        %1026 = vmatprep.subr.bf16.mxu0 0
        %1027 = vmatpush1.bf16.msra.mxu0 0
        %1028 = vmatprep.subr.bf16.mxu0 0
        %1029 = vmatpush1.bf16.msra.mxu0 0
        %1030 = vmatprep.subr.bf16.mxu0 0
        %1031 = vmatpush1.bf16.msra.mxu0 0
        %1032 = vmatprep.subr.bf16.mxu0 0
        %1033 = vmatpush1.bf16.msra.mxu0 0
        %1034 = vmatprep.subr.bf16.mxu0 0
        %1035 = vmatpush1.bf16.msra.mxu0 0
        %1036 = vmatprep.subr.bf16.mxu0 0
        %1037 = vmatpush1.bf16.msra.mxu0 0
        %1038 = vmatprep.subr.bf16.mxu0 0
        %1039 = vmatpush1.bf16.msra.mxu0 0
        %1040 = vmatprep.mubr.bf16.mxu0 0
        %1041 = vmatmul.mubr.bf16.gmra.mrb[0].mxu0 %v1006
        %v1042 = vpop.f32.mrb[0].mxu0
        %v1043 = vadd.f32 0.0, %v1042
        %v1044 = vpop.f32.mrb[0].mxu0
        %v1045 = vpop.f32.mrb[0].mxu0
        %v1046 = vadd.f32 0.0, %v1045
        %v1047 = vpop.f32.mrb[0].mxu0
        %1048 = vdwg.mxu0
        %v1049 = vpack.c.bf16 %v1046, %v1043
        %1050 = vrot.lane.b32.xlu0 %v415, 96
        %v1051 = vpop.permute.xlu0 %1050
        %1052 = vrot.lane.b32.xlu0 %v489, 96
        %v1053 = vpop.permute.xlu0 %1052
        %v1055 = vsel %vm564, %v1051, 0
        %v1058 = vsel %vm564, %v1053, 0
        %1060 = vmatprep.subr.bf16.mxu0 0
        %1061 = vmatpush1.bf16.xpose.msra.mxu0 %v1058
        %1062 = vmatprep.subr.bf16.mxu0 0
        %1063 = vmatpush1.bf16.xpose.msra.mxu0 0
        %1064 = vmatprep.subr.bf16.mxu0 0
        %1065 = vmatpush1.bf16.xpose.msra.mxu0 0
        %1066 = vmatprep.subr.bf16.mxu0 0
        %1067 = vmatpush1.bf16.xpose.msra.mxu0 0
        %1068 = vmatprep.subr.bf16.mxu0 0
        %1069 = vmatpush1.bf16.xpose.msra.mxu0 0
        %1070 = vmatprep.subr.bf16.mxu0 0
        %1071 = vmatpush1.bf16.xpose.msra.mxu0 0
        %1072 = vmatprep.subr.bf16.mxu0 0
        %1073 = vmatpush1.bf16.xpose.msra.mxu0 0
        %1074 = vmatprep.subr.bf16.mxu0 0
        %1075 = vmatpush1.bf16.xpose.msra.mxu0 0
        %1076 = vmatprep.subr.bf16.mxu0 0
        %1077 = vmatpush1.bf16.xpose.msra.mxu0 0
        %1078 = vmatprep.subr.bf16.mxu0 0
        %1079 = vmatpush1.bf16.xpose.msra.mxu0 0
        %1080 = vmatprep.subr.bf16.mxu0 0
        %1081 = vmatpush1.bf16.xpose.msra.mxu0 0
        %1082 = vmatprep.subr.bf16.mxu0 0
        %1083 = vmatpush1.bf16.xpose.msra.mxu0 0
        %1084 = vmatprep.subr.bf16.mxu0 0
        %1085 = vmatpush1.bf16.xpose.msra.mxu0 0
        %1086 = vmatprep.subr.bf16.mxu0 0
        %1087 = vmatpush1.bf16.xpose.msra.mxu0 0
        %1088 = vmatprep.subr.bf16.mxu0 0
        %1089 = vmatpush1.bf16.xpose.msra.mxu0 0
        %1090 = vmatprep.subr.bf16.mxu0 0
        %1091 = vmatpush1.bf16.xpose.msra.mxu0 0
        %1092 = vmatprep.mubr.bf16.mxu0 0
        %1093 = vmatmul.mubr.bf16.gmra.mrb[0].mxu0 %v1055
        %v1094 = vpop.f32.mrb[0].mxu0
        %v1095 = vadd.f32 0.0, %v1094
        %v1096 = vpop.f32.mrb[0].mxu0
        %v1097 = vpop.f32.mrb[0].mxu0
        %v1098 = vadd.f32 0.0, %v1097
        %v1099 = vpop.f32.mrb[0].mxu0
        %1100 = vdwg.mxu0
        %v1101 = vsel %vm612, %v1095, -inf
        %1102 = vmax.xlane.f32.xlu0 %v1101
        %v1103 = vpop.xlane.xlu0 %1102
        %v1104 = vsel %vm612, %v1098, -inf
        %1105 = vmax.xlane.f32.xlu0 %v1104
        %v1106 = vpop.xlane.xlu0 %1105
        %v1107 = vsub.f32 %v1095, %v1103
        %v1108 = vsub.f32 %v1098, %v1106
        %v1109 = vmul.f32 %v1107, 1.442695
        %v1110 = vpow.pop %v1109
        %v1111 = vmul.f32 %v1108, 1.442695
        %v1112 = vpow.pop %v1111
        %v1113 = vsel %vm612, %v1110, 0.0
        %1114 = vadd.xlane.f32.xlu0 %v1113
        %v1115 = vpop.xlane.xlu0 %1114
        %v1116 = vsel %vm612, %v1112, 0.0
        %1117 = vadd.xlane.f32.xlu0 %v1116
        %v1118 = vpop.xlane.xlu0 %1117
        %v1119 = vrcp.pop %v1115
        %v1120 = vrcp.pop %v1118
        %v1121 = vmul.f32 %v1110, %v1119
        %v1122 = vmul.f32 %v1112, %v1120
        %v1123 = vpack.c.bf16 %v1122, %v1121
        %1124 = vrot.lane.b32.xlu0 %v563, 96
        %v1125 = vpop.permute.xlu0 %1124
        %v1128 = vsel %vm612, %v1123, 0
        %1130 = vmatprep.subr.bf16.mxu0 0
        %1131 = vmatpush1.bf16.msra.mxu0 %v1125
        %1132 = vmatprep.subr.bf16.mxu0 0
        %1133 = vmatpush1.bf16.msra.mxu0 0
        %1134 = vmatprep.subr.bf16.mxu0 0
        %1135 = vmatpush1.bf16.msra.mxu0 0
        %1136 = vmatprep.subr.bf16.mxu0 0
        %1137 = vmatpush1.bf16.msra.mxu0 0
        %1138 = vmatprep.subr.bf16.mxu0 0
        %1139 = vmatpush1.bf16.msra.mxu0 0
        %1140 = vmatprep.subr.bf16.mxu0 0
        %1141 = vmatpush1.bf16.msra.mxu0 0
        %1142 = vmatprep.subr.bf16.mxu0 0
        %1143 = vmatpush1.bf16.msra.mxu0 0
        %1144 = vmatprep.subr.bf16.mxu0 0
        %1145 = vmatpush1.bf16.msra.mxu0 0
        %1146 = vmatprep.subr.bf16.mxu0 0
        %1147 = vmatpush1.bf16.msra.mxu0 0
        %1148 = vmatprep.subr.bf16.mxu0 0
        %1149 = vmatpush1.bf16.msra.mxu0 0
        %1150 = vmatprep.subr.bf16.mxu0 0
        %1151 = vmatpush1.bf16.msra.mxu0 0
        %1152 = vmatprep.subr.bf16.mxu0 0
        %1153 = vmatpush1.bf16.msra.mxu0 0
        %1154 = vmatprep.subr.bf16.mxu0 0
        %1155 = vmatpush1.bf16.msra.mxu0 0
        %1156 = vmatprep.subr.bf16.mxu0 0
        %1157 = vmatpush1.bf16.msra.mxu0 0
        %1158 = vmatprep.subr.bf16.mxu0 0
        %1159 = vmatpush1.bf16.msra.mxu0 0
        %1160 = vmatprep.subr.bf16.mxu0 0
        %1161 = vmatpush1.bf16.msra.mxu0 0
        %1162 = vmatprep.mubr.bf16.mxu0 0
        %1163 = vmatmul.mubr.bf16.gmra.mrb[0].mxu0 %v1128
        %v1164 = vpop.f32.mrb[0].mxu0
        %v1165 = vadd.f32 0.0, %v1164
        %v1166 = vpop.f32.mrb[0].mxu0
        %v1167 = vpop.f32.mrb[0].mxu0
        %v1168 = vadd.f32 0.0, %v1167
        %v1169 = vpop.f32.mrb[0].mxu0
        %1170 = vdwg.mxu0
        %v1171 = vpack.c.bf16 %v1168, %v1165
        %1172 = vrot.lane.b32.xlu0 %v415, 88
        %v1173 = vpop.permute.xlu0 %1172
        %1174 = vrot.lane.b32.xlu0 %v489, 88
        %v1175 = vpop.permute.xlu0 %1174
        %v1177 = vsel %vm564, %v1173, 0
        %v1180 = vsel %vm564, %v1175, 0
        %1182 = vmatprep.subr.bf16.mxu0 0
        %1183 = vmatpush1.bf16.xpose.msra.mxu0 %v1180
        %1184 = vmatprep.subr.bf16.mxu0 0
        %1185 = vmatpush1.bf16.xpose.msra.mxu0 0
        %1186 = vmatprep.subr.bf16.mxu0 0
        %1187 = vmatpush1.bf16.xpose.msra.mxu0 0
        %1188 = vmatprep.subr.bf16.mxu0 0
        %1189 = vmatpush1.bf16.xpose.msra.mxu0 0
        %1190 = vmatprep.subr.bf16.mxu0 0
        %1191 = vmatpush1.bf16.xpose.msra.mxu0 0
        %1192 = vmatprep.subr.bf16.mxu0 0
        %1193 = vmatpush1.bf16.xpose.msra.mxu0 0
        %1194 = vmatprep.subr.bf16.mxu0 0
        %1195 = vmatpush1.bf16.xpose.msra.mxu0 0
        %1196 = vmatprep.subr.bf16.mxu0 0
        %1197 = vmatpush1.bf16.xpose.msra.mxu0 0
        %1198 = vmatprep.subr.bf16.mxu0 0
        %1199 = vmatpush1.bf16.xpose.msra.mxu0 0
        %1200 = vmatprep.subr.bf16.mxu0 0
        %1201 = vmatpush1.bf16.xpose.msra.mxu0 0
        %1202 = vmatprep.subr.bf16.mxu0 0
        %1203 = vmatpush1.bf16.xpose.msra.mxu0 0
        %1204 = vmatprep.subr.bf16.mxu0 0
        %1205 = vmatpush1.bf16.xpose.msra.mxu0 0
        %1206 = vmatprep.subr.bf16.mxu0 0
        %1207 = vmatpush1.bf16.xpose.msra.mxu0 0
        %1208 = vmatprep.subr.bf16.mxu0 0
        %1209 = vmatpush1.bf16.xpose.msra.mxu0 0
        %1210 = vmatprep.subr.bf16.mxu0 0
        %1211 = vmatpush1.bf16.xpose.msra.mxu0 0
        %1212 = vmatprep.subr.bf16.mxu0 0
        %1213 = vmatpush1.bf16.xpose.msra.mxu0 0
        %1214 = vmatprep.mubr.bf16.mxu0 0
        %1215 = vmatmul.mubr.bf16.gmra.mrb[0].mxu0 %v1177
        %v1216 = vpop.f32.mrb[0].mxu0
        %v1217 = vadd.f32 0.0, %v1216
        %v1218 = vpop.f32.mrb[0].mxu0
        %v1219 = vpop.f32.mrb[0].mxu0
        %v1220 = vadd.f32 0.0, %v1219
        %v1221 = vpop.f32.mrb[0].mxu0
        %1222 = vdwg.mxu0
        %v1223 = vsel %vm612, %v1217, -inf
        %1224 = vmax.xlane.f32.xlu0 %v1223
        %v1225 = vpop.xlane.xlu0 %1224
        %v1226 = vsel %vm612, %v1220, -inf
        %1227 = vmax.xlane.f32.xlu0 %v1226
        %v1228 = vpop.xlane.xlu0 %1227
        %v1229 = vsub.f32 %v1217, %v1225
        %v1230 = vsub.f32 %v1220, %v1228
        %v1231 = vmul.f32 %v1229, 1.442695
        %v1232 = vpow.pop %v1231
        %v1233 = vmul.f32 %v1230, 1.442695
        %v1234 = vpow.pop %v1233
        %v1235 = vsel %vm612, %v1232, 0.0
        %1236 = vadd.xlane.f32.xlu0 %v1235
        %v1237 = vpop.xlane.xlu0 %1236
        %v1238 = vsel %vm612, %v1234, 0.0
        %1239 = vadd.xlane.f32.xlu0 %v1238
        %v1240 = vpop.xlane.xlu0 %1239
        %v1241 = vrcp.pop %v1237
        %v1242 = vrcp.pop %v1240
        %v1243 = vmul.f32 %v1232, %v1241
        %v1244 = vmul.f32 %v1234, %v1242
        %v1245 = vpack.c.bf16 %v1244, %v1243
        %1246 = vrot.lane.b32.xlu0 %v563, 88
        %v1247 = vpop.permute.xlu0 %1246
        %v1250 = vsel %vm612, %v1245, 0
        %1252 = vmatprep.subr.bf16.mxu0 0
        %1253 = vmatpush1.bf16.msra.mxu0 %v1247
        %1254 = vmatprep.subr.bf16.mxu0 0
        %1255 = vmatpush1.bf16.msra.mxu0 0
        %1256 = vmatprep.subr.bf16.mxu0 0
        %1257 = vmatpush1.bf16.msra.mxu0 0
        %1258 = vmatprep.subr.bf16.mxu0 0
        %1259 = vmatpush1.bf16.msra.mxu0 0
        %1260 = vmatprep.subr.bf16.mxu0 0
        %1261 = vmatpush1.bf16.msra.mxu0 0
        %1262 = vmatprep.subr.bf16.mxu0 0
        %1263 = vmatpush1.bf16.msra.mxu0 0
        %1264 = vmatprep.subr.bf16.mxu0 0
        %1265 = vmatpush1.bf16.msra.mxu0 0
        %1266 = vmatprep.subr.bf16.mxu0 0
        %1267 = vmatpush1.bf16.msra.mxu0 0
        %1268 = vmatprep.subr.bf16.mxu0 0
        %1269 = vmatpush1.bf16.msra.mxu0 0
        %1270 = vmatprep.subr.bf16.mxu0 0
        %1271 = vmatpush1.bf16.msra.mxu0 0
        %1272 = vmatprep.subr.bf16.mxu0 0
        %1273 = vmatpush1.bf16.msra.mxu0 0
        %1274 = vmatprep.subr.bf16.mxu0 0
        %1275 = vmatpush1.bf16.msra.mxu0 0
        %1276 = vmatprep.subr.bf16.mxu0 0
        %1277 = vmatpush1.bf16.msra.mxu0 0
        %1278 = vmatprep.subr.bf16.mxu0 0
        %1279 = vmatpush1.bf16.msra.mxu0 0
        %1280 = vmatprep.subr.bf16.mxu0 0
        %1281 = vmatpush1.bf16.msra.mxu0 0
        %1282 = vmatprep.subr.bf16.mxu0 0
        %1283 = vmatpush1.bf16.msra.mxu0 0
        %1284 = vmatprep.mubr.bf16.mxu0 0
        %1285 = vmatmul.mubr.bf16.gmra.mrb[0].mxu0 %v1250
        %v1286 = vpop.f32.mrb[0].mxu0
        %v1287 = vadd.f32 0.0, %v1286
        %v1288 = vpop.f32.mrb[0].mxu0
        %v1289 = vpop.f32.mrb[0].mxu0
        %v1290 = vadd.f32 0.0, %v1289
        %v1291 = vpop.f32.mrb[0].mxu0
        %1292 = vdwg.mxu0
        %v1293 = vpack.c.bf16 %v1290, %v1287
        %1294 = vrot.lane.b32.xlu0 %v415, 80
        %v1295 = vpop.permute.xlu0 %1294
        %1296 = vrot.lane.b32.xlu0 %v489, 80
        %v1297 = vpop.permute.xlu0 %1296
        %v1299 = vsel %vm564, %v1295, 0
        %v1302 = vsel %vm564, %v1297, 0
        %1304 = vmatprep.subr.bf16.mxu0 0
        %1305 = vmatpush1.bf16.xpose.msra.mxu0 %v1302
        %1306 = vmatprep.subr.bf16.mxu0 0
        %1307 = vmatpush1.bf16.xpose.msra.mxu0 0
        %1308 = vmatprep.subr.bf16.mxu0 0
        %1309 = vmatpush1.bf16.xpose.msra.mxu0 0
        %1310 = vmatprep.subr.bf16.mxu0 0
        %1311 = vmatpush1.bf16.xpose.msra.mxu0 0
        %1312 = vmatprep.subr.bf16.mxu0 0
        %1313 = vmatpush1.bf16.xpose.msra.mxu0 0
        %1314 = vmatprep.subr.bf16.mxu0 0
        %1315 = vmatpush1.bf16.xpose.msra.mxu0 0
        %1316 = vmatprep.subr.bf16.mxu0 0
        %1317 = vmatpush1.bf16.xpose.msra.mxu0 0
        %1318 = vmatprep.subr.bf16.mxu0 0
        %1319 = vmatpush1.bf16.xpose.msra.mxu0 0
        %1320 = vmatprep.subr.bf16.mxu0 0
        %1321 = vmatpush1.bf16.xpose.msra.mxu0 0
        %1322 = vmatprep.subr.bf16.mxu0 0
        %1323 = vmatpush1.bf16.xpose.msra.mxu0 0
        %1324 = vmatprep.subr.bf16.mxu0 0
        %1325 = vmatpush1.bf16.xpose.msra.mxu0 0
        %1326 = vmatprep.subr.bf16.mxu0 0
        %1327 = vmatpush1.bf16.xpose.msra.mxu0 0
        %1328 = vmatprep.subr.bf16.mxu0 0
        %1329 = vmatpush1.bf16.xpose.msra.mxu0 0
        %1330 = vmatprep.subr.bf16.mxu0 0
        %1331 = vmatpush1.bf16.xpose.msra.mxu0 0
        %1332 = vmatprep.subr.bf16.mxu0 0
        %1333 = vmatpush1.bf16.xpose.msra.mxu0 0
        %1334 = vmatprep.subr.bf16.mxu0 0
        %1335 = vmatpush1.bf16.xpose.msra.mxu0 0
        %1336 = vmatprep.mubr.bf16.mxu0 0
        %1337 = vmatmul.mubr.bf16.gmra.mrb[0].mxu0 %v1299
        %v1338 = vpop.f32.mrb[0].mxu0
        %v1339 = vadd.f32 0.0, %v1338
        %v1340 = vpop.f32.mrb[0].mxu0
        %v1341 = vpop.f32.mrb[0].mxu0
        %v1342 = vadd.f32 0.0, %v1341
        %v1343 = vpop.f32.mrb[0].mxu0
        %1344 = vdwg.mxu0
        %v1345 = vsel %vm612, %v1339, -inf
        %1346 = vmax.xlane.f32.xlu0 %v1345
        %v1347 = vpop.xlane.xlu0 %1346
        %v1348 = vsel %vm612, %v1342, -inf
        %1349 = vmax.xlane.f32.xlu0 %v1348
        %v1350 = vpop.xlane.xlu0 %1349
        %v1351 = vsub.f32 %v1339, %v1347
        %v1352 = vsub.f32 %v1342, %v1350
        %v1353 = vmul.f32 %v1351, 1.442695
        %v1354 = vpow.pop %v1353
        %v1355 = vmul.f32 %v1352, 1.442695
        %v1356 = vpow.pop %v1355
        %v1357 = vsel %vm612, %v1354, 0.0
        %1358 = vadd.xlane.f32.xlu0 %v1357
        %v1359 = vpop.xlane.xlu0 %1358
        %v1360 = vsel %vm612, %v1356, 0.0
        %1361 = vadd.xlane.f32.xlu0 %v1360
        %v1362 = vpop.xlane.xlu0 %1361
        %v1363 = vrcp.pop %v1359
        %v1364 = vrcp.pop %v1362
        %v1365 = vmul.f32 %v1354, %v1363
        %v1366 = vmul.f32 %v1356, %v1364
        %v1367 = vpack.c.bf16 %v1366, %v1365
        %1368 = vrot.lane.b32.xlu0 %v563, 80
        %v1369 = vpop.permute.xlu0 %1368
        %v1372 = vsel %vm612, %v1367, 0
        %1374 = vmatprep.subr.bf16.mxu0 0
        %1375 = vmatpush1.bf16.msra.mxu0 %v1369
        %1376 = vmatprep.subr.bf16.mxu0 0
        %1377 = vmatpush1.bf16.msra.mxu0 0
        %1378 = vmatprep.subr.bf16.mxu0 0
        %1379 = vmatpush1.bf16.msra.mxu0 0
        %1380 = vmatprep.subr.bf16.mxu0 0
        %1381 = vmatpush1.bf16.msra.mxu0 0
        %1382 = vmatprep.subr.bf16.mxu0 0
        %1383 = vmatpush1.bf16.msra.mxu0 0
        %1384 = vmatprep.subr.bf16.mxu0 0
        %1385 = vmatpush1.bf16.msra.mxu0 0
        %1386 = vmatprep.subr.bf16.mxu0 0
        %1387 = vmatpush1.bf16.msra.mxu0 0
        %1388 = vmatprep.subr.bf16.mxu0 0
        %1389 = vmatpush1.bf16.msra.mxu0 0
        %1390 = vmatprep.subr.bf16.mxu0 0
        %1391 = vmatpush1.bf16.msra.mxu0 0
        %1392 = vmatprep.subr.bf16.mxu0 0
        %1393 = vmatpush1.bf16.msra.mxu0 0
        %1394 = vmatprep.subr.bf16.mxu0 0
        %1395 = vmatpush1.bf16.msra.mxu0 0
        %1396 = vmatprep.subr.bf16.mxu0 0
        %1397 = vmatpush1.bf16.msra.mxu0 0
        %1398 = vmatprep.subr.bf16.mxu0 0
        %1399 = vmatpush1.bf16.msra.mxu0 0
        %1400 = vmatprep.subr.bf16.mxu0 0
        %1401 = vmatpush1.bf16.msra.mxu0 0
        %1402 = vmatprep.subr.bf16.mxu0 0
        %1403 = vmatpush1.bf16.msra.mxu0 0
        %1404 = vmatprep.subr.bf16.mxu0 0
        %1405 = vmatpush1.bf16.msra.mxu0 0
        %1406 = vmatprep.mubr.bf16.mxu0 0
        %1407 = vmatmul.mubr.bf16.gmra.mrb[0].mxu0 %v1372
        %v1408 = vpop.f32.mrb[0].mxu0
        %v1409 = vadd.f32 0.0, %v1408
        %v1410 = vpop.f32.mrb[0].mxu0
        %v1411 = vpop.f32.mrb[0].mxu0
        %v1412 = vadd.f32 0.0, %v1411
        %v1413 = vpop.f32.mrb[0].mxu0
        %1414 = vdwg.mxu0
        %v1415 = vpack.c.bf16 %v1412, %v1409
        %1416 = vrot.lane.b32.xlu0 %v415, 72
        %v1417 = vpop.permute.xlu0 %1416
        %1418 = vrot.lane.b32.xlu0 %v489, 72
        %v1419 = vpop.permute.xlu0 %1418
        %v1421 = vsel %vm564, %v1417, 0
        %v1424 = vsel %vm564, %v1419, 0
        %1426 = vmatprep.subr.bf16.mxu0 0
        %1427 = vmatpush1.bf16.xpose.msra.mxu0 %v1424
        %1428 = vmatprep.subr.bf16.mxu0 0
        %1429 = vmatpush1.bf16.xpose.msra.mxu0 0
        %1430 = vmatprep.subr.bf16.mxu0 0
        %1431 = vmatpush1.bf16.xpose.msra.mxu0 0
        %1432 = vmatprep.subr.bf16.mxu0 0
        %1433 = vmatpush1.bf16.xpose.msra.mxu0 0
        %1434 = vmatprep.subr.bf16.mxu0 0
        %1435 = vmatpush1.bf16.xpose.msra.mxu0 0
        %1436 = vmatprep.subr.bf16.mxu0 0
        %1437 = vmatpush1.bf16.xpose.msra.mxu0 0
        %1438 = vmatprep.subr.bf16.mxu0 0
        %1439 = vmatpush1.bf16.xpose.msra.mxu0 0
        %1440 = vmatprep.subr.bf16.mxu0 0
        %1441 = vmatpush1.bf16.xpose.msra.mxu0 0
        %1442 = vmatprep.subr.bf16.mxu0 0
        %1443 = vmatpush1.bf16.xpose.msra.mxu0 0
        %1444 = vmatprep.subr.bf16.mxu0 0
        %1445 = vmatpush1.bf16.xpose.msra.mxu0 0
        %1446 = vmatprep.subr.bf16.mxu0 0
        %1447 = vmatpush1.bf16.xpose.msra.mxu0 0
        %1448 = vmatprep.subr.bf16.mxu0 0
        %1449 = vmatpush1.bf16.xpose.msra.mxu0 0
        %1450 = vmatprep.subr.bf16.mxu0 0
        %1451 = vmatpush1.bf16.xpose.msra.mxu0 0
        %1452 = vmatprep.subr.bf16.mxu0 0
        %1453 = vmatpush1.bf16.xpose.msra.mxu0 0
        %1454 = vmatprep.subr.bf16.mxu0 0
        %1455 = vmatpush1.bf16.xpose.msra.mxu0 0
        %1456 = vmatprep.subr.bf16.mxu0 0
        %1457 = vmatpush1.bf16.xpose.msra.mxu0 0
        %1458 = vmatprep.mubr.bf16.mxu0 0
        %1459 = vmatmul.mubr.bf16.gmra.mrb[0].mxu0 %v1421
        %v1460 = vpop.f32.mrb[0].mxu0
        %v1461 = vadd.f32 0.0, %v1460
        %v1462 = vpop.f32.mrb[0].mxu0
        %v1463 = vpop.f32.mrb[0].mxu0
        %v1464 = vadd.f32 0.0, %v1463
        %v1465 = vpop.f32.mrb[0].mxu0
        %1466 = vdwg.mxu0
        %v1467 = vsel %vm612, %v1461, -inf
        %1468 = vmax.xlane.f32.xlu0 %v1467
        %v1469 = vpop.xlane.xlu0 %1468
        %v1470 = vsel %vm612, %v1464, -inf
        %1471 = vmax.xlane.f32.xlu0 %v1470
        %v1472 = vpop.xlane.xlu0 %1471
        %v1473 = vsub.f32 %v1461, %v1469
        %v1474 = vsub.f32 %v1464, %v1472
        %v1475 = vmul.f32 %v1473, 1.442695
        %v1476 = vpow.pop %v1475
        %v1477 = vmul.f32 %v1474, 1.442695
        %v1478 = vpow.pop %v1477
        %v1479 = vsel %vm612, %v1476, 0.0
        %1480 = vadd.xlane.f32.xlu0 %v1479
        %v1481 = vpop.xlane.xlu0 %1480
        %v1482 = vsel %vm612, %v1478, 0.0
        %1483 = vadd.xlane.f32.xlu0 %v1482
        %v1484 = vpop.xlane.xlu0 %1483
        %v1485 = vrcp.pop %v1481
        %v1486 = vrcp.pop %v1484
        %v1487 = vmul.f32 %v1476, %v1485
        %v1488 = vmul.f32 %v1478, %v1486
        %v1489 = vpack.c.bf16 %v1488, %v1487
        %1490 = vrot.lane.b32.xlu0 %v563, 72
        %v1491 = vpop.permute.xlu0 %1490
        %v1494 = vsel %vm612, %v1489, 0
        %1496 = vmatprep.subr.bf16.mxu0 0
        %1497 = vmatpush1.bf16.msra.mxu0 %v1491
        %1498 = vmatprep.subr.bf16.mxu0 0
        %1499 = vmatpush1.bf16.msra.mxu0 0
        %1500 = vmatprep.subr.bf16.mxu0 0
        %1501 = vmatpush1.bf16.msra.mxu0 0
        %1502 = vmatprep.subr.bf16.mxu0 0
        %1503 = vmatpush1.bf16.msra.mxu0 0
        %1504 = vmatprep.subr.bf16.mxu0 0
        %1505 = vmatpush1.bf16.msra.mxu0 0
        %1506 = vmatprep.subr.bf16.mxu0 0
        %1507 = vmatpush1.bf16.msra.mxu0 0
        %1508 = vmatprep.subr.bf16.mxu0 0
        %1509 = vmatpush1.bf16.msra.mxu0 0
        %1510 = vmatprep.subr.bf16.mxu0 0
        %1511 = vmatpush1.bf16.msra.mxu0 0
        %1512 = vmatprep.subr.bf16.mxu0 0
        %1513 = vmatpush1.bf16.msra.mxu0 0
        %1514 = vmatprep.subr.bf16.mxu0 0
        %1515 = vmatpush1.bf16.msra.mxu0 0
        %1516 = vmatprep.subr.bf16.mxu0 0
        %1517 = vmatpush1.bf16.msra.mxu0 0
        %1518 = vmatprep.subr.bf16.mxu0 0
        %1519 = vmatpush1.bf16.msra.mxu0 0
        %1520 = vmatprep.subr.bf16.mxu0 0
        %1521 = vmatpush1.bf16.msra.mxu0 0
        %1522 = vmatprep.subr.bf16.mxu0 0
        %1523 = vmatpush1.bf16.msra.mxu0 0
        %1524 = vmatprep.subr.bf16.mxu0 0
        %1525 = vmatpush1.bf16.msra.mxu0 0
        %1526 = vmatprep.subr.bf16.mxu0 0
        %1527 = vmatpush1.bf16.msra.mxu0 0
        %1528 = vmatprep.mubr.bf16.mxu0 0
        %1529 = vmatmul.mubr.bf16.gmra.mrb[0].mxu0 %v1494
        %v1530 = vpop.f32.mrb[0].mxu0
        %v1531 = vadd.f32 0.0, %v1530
        %v1532 = vpop.f32.mrb[0].mxu0
        %v1533 = vpop.f32.mrb[0].mxu0
        %v1534 = vadd.f32 0.0, %v1533
        %v1535 = vpop.f32.mrb[0].mxu0
        %1536 = vdwg.mxu0
        %v1537 = vpack.c.bf16 %v1534, %v1531
        %1539 = vrot.lane.b32.xlu0 %v805, 8
        %v1540 = vpop.permute.xlu0 %1539
        %1542 = vrot.lane.b32.xlu0 %v927, 16
        %v1543 = vpop.permute.xlu0 %1542
        %1545 = vrot.lane.b32.xlu0 %v1049, 24
        %v1546 = vpop.permute.xlu0 %1545
        %1548 = vrot.lane.b32.xlu0 %v1171, 32
        %v1549 = vpop.permute.xlu0 %1548
        %1551 = vrot.lane.b32.xlu0 %v1293, 40
        %v1552 = vpop.permute.xlu0 %1551
        %1554 = vrot.lane.b32.xlu0 %v1415, 48
        %v1555 = vpop.permute.xlu0 %1554
        %1557 = vrot.lane.b32.xlu0 %v1537, 56
        %v1558 = vpop.permute.xlu0 %1557
        %v1561 = vsel %vm564, %v680, %v1540
        %v1563 = vsel %vm612, %v1561, %v1543
        %vm1564 = vcmask 195584
        %v1566 = vsel %vm1564, %v1563, %v1546
        %vm1567 = vcmask 261120
        %v1569 = vsel %vm1567, %v1566, %v1549
        %vm1570 = vcmask 326656
        %v1572 = vsel %vm1570, %v1569, %v1552
        %vm1573 = vcmask 392192
        %v1575 = vsel %vm1573, %v1572, %v1555
        %vm1576 = vcmask 457728
        %v1578 = vsel %vm1576, %v1575, %v1558
        %v1579 = vld [vmem:[#allocation10] sm:$0xf]
        %v1580 = vld [vmem:[#allocation10 + $0x4] sm:$0xf]
        %v1581 = vld [vmem:[#allocation10 + $0x8] sm:$0xf]
        %v1582 = vld [vmem:[#allocation10 + $0xc] sm:$0xf]
        %v1583 = vld [vmem:[#allocation10 + $0x10] sm:$0xf]
        %v1584 = vld [vmem:[#allocation10 + $0x14] sm:$0xf]
        %v1585 = vld [vmem:[#allocation10 + $0x18] sm:$0xf]
        %v1586 = vld [vmem:[#allocation10 + $0x1c] sm:$0xf]
        %v1587 = vld [vmem:[%s5] sm:$0x1]
        %v1589 = vlaneseq
        %v1590 = vshrl.u32 %v1589, 7
        %v1591 = vsub.s32 0, %v1590
        %v1592 = vrot.slane %v1587, %v1591
        %v1602 = vunpack.c.l.b16 %v1579
        %v1603 = vunpack.c.l.b16 %v1580
        %v1604 = vunpack.c.l.b16 %v1581
        %v1605 = vunpack.c.l.b16 %v1582
        %v1606 = vunpack.c.l.b16 %v1583
        %v1607 = vunpack.c.l.b16 %v1584
        %v1608 = vunpack.c.l.b16 %v1585
        %v1609 = vunpack.c.l.b16 %v1586
        %v1610 = vpack.c.b16 %v1603, %v1602
        %v1611 = vpack.c.b16 %v1605, %v1604
        %v1612 = vpack.c.b16 %v1607, %v1606
        %v1613 = vpack.c.b16 %v1609, %v1608
        %v1618 = vsel %vm370, %v1578, 0
        %1620 = vmatprep.subr.bf16.mxu0 0
        %1621 = vmatpush1.bf16.msra.mxu0 %v1610
        %1622 = vmatprep.subr.bf16.mxu0 0
        %1623 = vmatpush1.bf16.msra.mxu0 %v1611
        %1624 = vmatprep.subr.bf16.mxu0 0
        %1625 = vmatpush1.bf16.msra.mxu0 %v1612
        %1626 = vmatprep.subr.bf16.mxu0 0
        %1627 = vmatpush1.bf16.msra.mxu0 %v1613
        %1628 = vmatprep.subr.bf16.mxu0 0
        %1629 = vmatpush1.bf16.msra.mxu0 0
        %1630 = vmatprep.subr.bf16.mxu0 0
        %1631 = vmatpush1.bf16.msra.mxu0 0
        %1632 = vmatprep.subr.bf16.mxu0 0
        %1633 = vmatpush1.bf16.msra.mxu0 0
        %1634 = vmatprep.subr.bf16.mxu0 0
        %1635 = vmatpush1.bf16.msra.mxu0 0
        %1636 = vmatprep.subr.bf16.mxu0 0
        %1637 = vmatpush1.bf16.msra.mxu0 0
        %1638 = vmatprep.subr.bf16.mxu0 0
        %1639 = vmatpush1.bf16.msra.mxu0 0
        %1640 = vmatprep.subr.bf16.mxu0 0
        %1641 = vmatpush1.bf16.msra.mxu0 0
        %1642 = vmatprep.subr.bf16.mxu0 0
        %1643 = vmatpush1.bf16.msra.mxu0 0
        %1644 = vmatprep.subr.bf16.mxu0 0
        %1645 = vmatpush1.bf16.msra.mxu0 0
        %1646 = vmatprep.subr.bf16.mxu0 0
        %1647 = vmatpush1.bf16.msra.mxu0 0
        %1648 = vmatprep.subr.bf16.mxu0 0
        %1649 = vmatpush1.bf16.msra.mxu0 0
        %1650 = vmatprep.subr.bf16.mxu0 0
        %1651 = vmatpush1.bf16.msra.mxu0 0
        %1652 = vmatprep.mubr.bf16.mxu0 0
        %1653 = vmatmul.mubr.bf16.gmra.mrb[0].mxu0 %v1618
        %v1654 = vpop.f32.mrb[0].mxu0
        %v1655 = vadd.f32 %v1592, %v1654
        %v1656 = vpop.f32.mrb[0].mxu0
        %v1657 = vpop.f32.mrb[0].mxu0
        %v1658 = vadd.f32 %v1592, %v1657
        %v1659 = vpop.f32.mrb[0].mxu0
        %1660 = vdwg.mxu0
        %1661 = vst.msk [vmem:[%s327] sm:$0xff] %vm370, %v1655
        %1662 = vst.msk [vmem:[%s327 + $0x8] sm:$0xff] %vm370, %v1658
        %s1663 = sand.u32 %s164, 1
        %s1664 = scalar_lea.sflag [#allocation4], %s1663
        %s1665 = sand.u32 %s164, 1
        %s1666 = smul.addr %s1665, 16
        %s1667 = scalar_lea.vmem [#allocation11], %s1666
        // Predicated region
        $region65: #{tpu_custom_call.1} parent=43 // pred_check
          %p1668 = pneg %p174
        $region66: #{tpu_custom_call.1} parent=43 // pred_check_branch
          %1670 = sbr.rel (%p1668) target = $region68
        $region67: #{tpu_custom_call.1} parent=43 // pred_region
          %s1671 = smul.u32 2, %s25
          %s1673 = ssub.s32 256, 256
          %1674 = vsyncadd %s1664, %s1673
          %s1675 = smul.addr %s1671, 128
          %s1676 = scalar_lea.hbm %s6, %s1675
          %s1677 = sshll.u32 %s1667, 4
          %s1678 = int_to_ptr.vmem [resolvable:$true] %s1677
          %1683 = dma.vmem_to_hbm [thread:$0]  %s1678, 256, %s1676, %s1664, 128, 128, 8
        $region68: #{tpu_custom_call.1} parent=43 // pred_fallthru
          _
      $region44: #{tpu_custom_call.1} parent=5 // pred_fallthru
        _
      %p1684 = scmp.le.s32.totalorder 2, %s20
      // Predicated region
      $region69: #{tpu_custom_call.1} parent=5 // pred_check
        %p1685 = pneg %p1684
      $region70: #{tpu_custom_call.1} parent=5 // pred_check_branch
        %1687 = sbr.rel (%p1685) target = $region72
      $region71: #{tpu_custom_call.1} parent=5 // pred_region
        %s1688 = ssub.s32 %s20, 2
        // Predicated region
        $region73: #{tpu_custom_call.1} parent=71 // pred_check
          %p1689 = pneg %p180
        $region74: #{tpu_custom_call.1} parent=71 // pred_check_branch
          %1691 = sbr.rel (%p1689) target = $region76
        $region75: #{tpu_custom_call.1} parent=71 // pred_region
          %s1692 = sand.u32 %s165, 1
          %s1693 = scalar_lea.sflag [#allocation4], %s1692
          %s1694 = sand.u32 %s165, 1
          %s1695 = smul.addr %s1694, 16
          %s1696 = scalar_lea.vmem [#allocation11], %s1695
          %1697 = dma.done %s1693, 256
        $region76: #{tpu_custom_call.1} parent=71 // pred_fallthru
          _
      $region72: #{tpu_custom_call.1} parent=5 // pred_fallthru
        _
    $region6: #{tpu_custom_call.1} parent=1 // loop_footer
      %s24 = sadd.s32 1, %s20
    $region7: #{tpu_custom_call.1} parent=1 // loop_footer_branch
      %19 = sbr.rel target = $region3
    $region8: #{tpu_custom_call.1} parent=1 // loop_exit
      _
    %1698 = vsyncpa [#allocation3], 1
    %s1699 = scalar_lea.sflag [#allocation3], 1
    %1700 = vsyncpa %s1699, 1
    %1701 = vsyncpa [#allocation6], 1
    %1702 = vsyncpa [#allocation9], 1
    %1703 = vsyncpa [#allocation4], 1
    %s1704 = scalar_lea.sflag [#allocation4], 1
    %1705 = vsyncpa %s1704, 1

</llo_original>
